<compile_context>
chip_gen: v7x
topology: tpu7x:2x2x1
jax: 0.10.0
libtpu: 0.0.40
codegen_flags: <defaults>
</compile_context>

<pallas_src>
import functools

import numpy as np
import jax
import jax.numpy as jnp
from jax.experimental import pallas as pl
from jax.experimental.pallas import tpu as pltpu

_ROW0 = 8      # sublane-aligned row offset of real data inside the padded scratch
_MAX_VPAD = 2  # largest vertical halo of any conv here (dil=2, pad=2)
_KH = 3        # conv kernel height


# ------------------------------ fused kernel -------------------------------

def _siamese_fused_kernel(x_ref, w1_ref, b1_ref, w2_ref, b2_ref, wj_ref, bj_ref,
                          wq_ref, rwx_ref, bc_ref,
                          out_ref, pad_ref, stg_ref,
                          *, bn, n_branches, H, WC):
    """Whole SiameseDilatedNet forward for one batch block, VMEM-resident.

    x_ref   : (n_branches, bn, H, WC)   stacked, lane-padded inputs (lane = x*C + c)
    w*_ref  : (3*WC, WC)                banded conv weights, vertical taps in K
    b*_ref  : (1, WC)                   channel bias tiled over x
    wq_ref  : (WC, P*n_cls)             head lane-contraction weight
    rwx_ref : (H, P*n_cls)              head row-pool weights
    bc_ref  : (1, n_cls)
    out_ref : (bn, n_cls)
    pad_ref : (n_branches*bn, HP, WC)   vertically padded activation scratch (shared)
    stg_ref : (n_branches*bn, H, 3*WC)  vertical-tap staging scratch (shared)
    """
    B = bn * n_branches
    nb = pad_ref.shape[0]

    # Zero ONLY the halo rows (perf item 4); these are the only padded rows any
    # conv tap ever reads, and the data rows are overwritten by each conv.
    zrows = jnp.zeros((nb, _MAX_VPAD, WC), jnp.float32)
    pad_ref[:, _ROW0 - _MAX_VPAD:_ROW0, :] = zrows
    pad_ref[:, _ROW0 + H:_ROW0 + H + _MAX_VPAD, :] = zrows

    def conv_relu(act, rows, wfold_ref, bias_ref, dil, pad):
        # act: (rows, H, WC).  Write once (sublane-aligned) into the padded
        # scratch, stage the 3 vertical taps into the K dimension (lane- and
        # sublane-aligned stores), then one MXU matmul does the whole conv.
        pad_ref[0:rows, _ROW0:_ROW0 + H, :] = act
        for dy in range(_KH):
            start = _ROW0 + dy * dil - pad                      # static offset
            stg_ref[0:rows, :, dy * WC:(dy + 1) * WC] = \
                pad_ref[0:rows, start:start + H, :]
        patches = stg_ref[0:rows].reshape(rows * H, _KH * WC)
        acc = jnp.dot(patches, wfold_ref[...],
                      preferred_element_type=jnp.float32)       # (rows*H, WC)
        return jnp.maximum(acc + bias_ref[...], 0.0)

    # shared branch convs: both branches & whole batch block in one matmul M
    x = x_ref[...].reshape(B, H, WC)
    h = conv_relu(x, B, w1_ref, b1_ref, dil=2, pad=2)                  # (B*H, WC)
    h = conv_relu(h.reshape(B, H, WC), B, w2_ref, b2_ref, dil=2, pad=2)

    # siamese merge: |res[1] - res[0]|
    hb = h.reshape(n_branches, bn, H, WC)
    d = jnp.abs(hb[1] - hb[0])                                         # (bn, H, WC)

    # joint conv (dil=1, pad=1)
    y = conv_relu(d, bn, wj_ref, bj_ref, dil=1, pad=1)                 # (bn*H, WC)

    # head: AdaptiveAvgPool2d + flatten(NCHW) + Linear, folded into (wq, rwx):
    #   logits[n,o] = sum_pi sum_h rwx[h, pi*ncls+o] * (y[n,h,:] @ wq)[pi*ncls+o] + b[o]
    n_cls = bc_ref.shape[1]
    q = jnp.dot(y, wq_ref[...], preferred_element_type=jnp.float32)    # (bn*H, P*n_cls)
    q3 = q.reshape(bn, H, q.shape[1])
    s = jnp.sum(q3 * rwx_ref[...][None, :, :], axis=1)                 # (bn, P*n_cls)
    p_lin = q.shape[1] // n_cls
    logits = s[:, 0:n_cls]
    for pi in range(1, p_lin):
        logits = logits + s[:, pi * n_cls:(pi + 1) * n_cls]
    out_ref[...] = logits + bc_ref[...]


# --------------------------- host-side packing ------------------------------

def _adaptive_pool_1d(in_size, out_size):
    """1-D AdaptiveAvgPool weights, shape (out_size, in_size)."""
    M = np.zeros((out_size, in_size), np.float32)
    for p in range(out_size):
        s = (p * in_size) // out_size
        e = -((-(p + 1) * in_size) // out_size)
        M[p, s:e] = 1.0 / (e - s)
    return M


def _band_weights(w, width, dil, pad):
    """(KH, KW, Cin, Cout) HWIO -> (KH*width*Cin, width*Cout).

    For each kernel row dy, folds the KW horizontal taps, their x-shift and the
    horizontal zero-padding into a banded matrix; the KH rows are stacked along
    K so the whole conv is one matmul over the staged vertical taps."""
    KH, KW, Cin, Cout = w.shape
    w_np = np.asarray(w, np.float32)
    band = np.zeros((KH, width * Cin, width * Cout), np.float32)
    for dy in range(KH):
        for dx in range(KW):
            for xo in range(width):
                xi = xo + dx * dil - pad
                if 0 <= xi < width:
                    band[dy, xi * Cin:(xi + 1) * Cin,
                         xo * Cout:(xo + 1) * Cout] += w_np[dy, dx]
    return jnp.asarray(band.reshape(KH * width * Cin, width * Cout))


def _fold_head(c_w, H, W, C, P, n_classes):
    """Fold AdaptiveAvgPool2d(P,P) + NCHW flatten + Linear into (wq, rwx):
      wq [w*C+c, pi*ncls+o] = sum_pj cw[pj,w] * Wlin[c,pi,pj,o]
      rwx[h,     pi*ncls+o] = rw[pi,h]
    so logits[n,o] = sum_pi sum_h rwx[h,pi*ncls+o] * (act[n,h,:] @ wq)[pi*ncls+o]."""
    rw = _adaptive_pool_1d(H, P)                                    # (P, H)
    cw = _adaptive_pool_1d(W, P)                                    # (P, W)
    wl = np.asarray(c_w, np.float32).reshape(C, P, P, n_classes)    # [c, pi, pj, o]
    wq = np.einsum('jw,cpjo->wcpo', cw, wl).reshape(W * C, P * n_classes)
    rwx = np.repeat(rw.T, n_classes, axis=1)                        # (H, P*n_cls)
    return jnp.asarray(wq), jnp.asarray(rwx)


def prepare_siamese_params(params, *, H, W, c_in, c_mid, patch_size_lin, n_classes):
    """One-time packing of module params into kernel-native constants."""
    assert c_in <= c_mid, "lane padding assumes c_in <= c_mid"
    c_pad = c_mid                                     # lane-pad input channels (item 5)
    b1_w = np.zeros((3, 3, c_pad, c_mid), np.float32)
    b1_w[:, :, :c_in, :] = np.asarray(params["b1_w"], np.float32)
    wq, rwx = _fold_head(params["c_w"], H, W, c_mid, patch_size_lin, n_classes)
    return {
        "c_pad": c_pad,
        "w1": _band_weights(b1_w, W, dil=2, pad=2),
        "b1": jnp.tile(params["b1_b"], W).reshape(1, W * c_mid),
        "w2": _band_weights(params["b2_w"], W, dil=2, pad=2),
        "b2": jnp.tile(params["b2_b"], W).reshape(1, W * c_mid),
        "wj": _band_weights(params["j_w"], W, dil=1, pad=1),
        "bj": jnp.tile(params["j_b"], W).reshape(1, W * c_mid),
        "wq": wq,
        "rwx": rwx,
        "bc": jnp.asarray(params["c_b"], jnp.float32).reshape(1, n_classes),
    }


# --------------------------- SiameseDilatedNet ------------------------------

def siamese_dilated_net_forward(data, kparams, *, n_branches=2, block_n=None):
    """data: list of n_branches NCHW arrays (as in the PyTorch module)."""
    # TODO(synk): extract_features list / 'joint' early-return paths and the
    # (invalid-torch) n_branches==3 concat line are not reproduced.
    assert n_branches == 2, "fused kernel implements the siamese (2-branch) path"
    N, c_in, H, W = data[0].shape
    WC = kparams["w1"].shape[1]                       # W * c_mid (= 128 here)
    c_pad = kparams["c_pad"]
    n_classes = kparams["bc"].shape[1]

    if block_n is None:
        block_n = min(N, 8)
    assert N % block_n == 0

    # NCHW -> lane-dense (N, H, W*c_pad); stack branches on a leading axis.
    def pack(d):
        d = jnp.transpose(d, (0, 2, 3, 1))                               # NHWC
        d = jnp.pad(d, ((0, 0), (0, 0), (0, 0), (0, c_pad - c_in)))
        return d.reshape(N, H, W * c_pad)

    x_all = jnp.stack([pack(d) for d in data], axis=0)   # (n_br, N, H, 128)

    HP = _ROW0 + H + 8            # padded scratch height (covers the 2-row halo)
    rows = block_n * n_branches

    kern = functools.partial(_siamese_fused_kernel, bn=block_n,
                             n_branches=n_branches, H=H, WC=WC)

    def full(a):                  # whole-array, grid-invariant block
        return pl.BlockSpec(a.shape, lambda i, _n=a.ndim: (0,) * _n)

    grid_spec = pltpu.PrefetchScalarGridSpec(
        num_scalar_prefetch=0,
        grid=(N // block_n,),
        in_specs=[
            pl.BlockSpec((n_branches, block_n, H, W * c_pad),
                         lambda i: (0, i, 0, 0)),
            full(kparams["w1"]), full(kparams["b1"]),
            full(kparams["w2"]), full(kparams["b2"]),
            full(kparams["wj"]), full(kparams["bj"]),
            full(kparams["wq"]), full(kparams["rwx"]),
            full(kparams["bc"]),
        ],
        out_specs=pl.BlockSpec((block_n, n_classes), lambda i: (i, 0)),
        scratch_shapes=[
            pltpu.VMEM((rows, HP, WC), jnp.float32),          # padded activations
            pltpu.VMEM((rows, H, _KH * WC), jnp.float32),     # vertical-tap staging
        ],
    )
    return pl.pallas_call(
        kern,
        out_shape=jax.ShapeDtypeStruct((N, n_classes), jnp.float32),
        grid_spec=grid_spec,
        compiler_params=pltpu.CompilerParams(
            dimension_semantics=("parallel",),
            vmem_limit_bytes=32 * 1024 * 1024),
    )(x_all, kparams["w1"], kparams["b1"], kparams["w2"], kparams["b2"],
      kparams["wj"], kparams["bj"], kparams["wq"], kparams["rwx"], kparams["bc"])


# ----------------------------- Reference (JAX) ------------------------------

def _ref_conv(x, w, b, dil, pad):
    out = jax.lax.conv_general_dilated(
        x, w, window_strides=(1, 1), padding=[(pad, pad), (pad, pad)],
        rhs_dilation=(dil, dil),
        dimension_numbers=("NHWC", "HWIO", "NHWC"))
    return jnp.maximum(out + b.reshape(1, 1, 1, -1), 0.0)


def _ref_forward(data, params, P):
    res = []
    for x in data:
        h = jnp.transpose(x, (0, 2, 3, 1))
        h = _ref_conv(h, params["b1_w"], params["b1_b"], 2, 2)
        h = _ref_conv(h, params["b2_w"], params["b2_b"], 2, 2)
        res.append(h)
    h = jnp.abs(res[1] - res[0])
    h = _ref_conv(h, params["j_w"], params["j_b"], 1, 1)
    N, H, W, C = h.shape
    h = h.reshape(N, P, H // P, P, W // P, C).mean(axis=(2, 4))
    h = jnp.transpose(h, (0, 3, 1, 2)).reshape(N, -1)
    return h @ params["c_w"] + params["c_b"]


# --------------------------------- main --------------------------------------

def _init_conv(key, kh, kw, cin, cout):
    kw_, kb_ = jax.random.split(key)
    fan = kh * kw * cin
    w = jax.random.normal(kw_, (kh, kw, cin, cout), jnp.float32) / jnp.sqrt(fan)
    b = 0.01 * jax.random.normal(kb_, (cout,), jnp.float32)
    return w, b


if __name__ == "__main__":
    N, C_IN, HW = 2, 4, 16
    C_MID = 8
    P = 4                      # patch_size_lin
    N_CLASSES = 2

    key = jax.random.PRNGKey(0)
    k = jax.random.split(key, 6)

    params = {}
    params["b1_w"], params["b1_b"] = _init_conv(k[0], 3, 3, C_IN, C_MID)
    params["b2_w"], params["b2_b"] = _init_conv(k[1], 3, 3, C_MID, C_MID)
    params["j_w"], params["j_b"] = _init_conv(k[2], 3, 3, C_MID, C_MID)
    cw_key, cb_key = jax.random.split(k[3])
    params["c_w"] = jax.random.normal(
        cw_key, (C_MID * P * P, N_CLASSES), jnp.float32) / jnp.sqrt(C_MID * P * P)
    params["c_b"] = 0.01 * jax.random.normal(cb_key, (N_CLASSES,), jnp.float32)

    x0 = jax.random.normal(k[4], (N, C_IN, HW, HW), jnp.float32)
    x1 = jax.random.normal(k[5], (N, C_IN, HW, HW), jnp.float32)
    data = [x0, x1]

    kparams = prepare_siamese_params(params, H=HW, W=HW, c_in=C_IN, c_mid=C_MID,
                                     patch_size_lin=P, n_classes=N_CLASSES)

    out = siamese_dilated_net_forward(data, kparams, n_branches=2)
    out = jax.block_until_ready(out)

    ref = jax.block_until_ready(_ref_forward(data, params, P))
    assert out.shape == (N, N_CLASSES)
    np.testing.assert_allclose(np.asarray(out), np.asarray(ref),
                               rtol=2e-3, atol=2e-3)
    print("KERNEL_OK")
</pallas_src>

<mosaic_0001>
module attributes {stable_mosaic.version = 11 : i64} {
  func.func @_siamese_fused_kernel(%arg0: i32, %arg1: memref<2x2x16x128xf32, #tpu.memory_space<vmem>>, %arg2: memref<384x128xf32, #tpu.memory_space<vmem>>, %arg3: memref<1x128xf32, #tpu.memory_space<vmem>>, %arg4: memref<384x128xf32, #tpu.memory_space<vmem>>, %arg5: memref<1x128xf32, #tpu.memory_space<vmem>>, %arg6: memref<384x128xf32, #tpu.memory_space<vmem>>, %arg7: memref<1x128xf32, #tpu.memory_space<vmem>>, %arg8: memref<128x8xf32, #tpu.memory_space<vmem>>, %arg9: memref<16x8xf32, #tpu.memory_space<vmem>>, %arg10: memref<1x2xf32, #tpu.memory_space<vmem>>, %arg11: memref<2x2xf32, #tpu.memory_space<vmem>>, %arg12: memref<4x32x128xf32, #tpu.memory_space<vmem>>, %arg13: memref<4x16x384xf32, #tpu.memory_space<vmem>>) attributes {dimension_semantics = [#tpu.dimension_semantics<parallel>], iteration_bounds = array<i64: 1>, scalar_prefetch = 0 : i64, scratch_operands = 2 : i64, tpu.core_type = #tpu.core_type<tc>, window_params = [{transform_indices = @transform_0, window_bounds = array<i64: 2, 2, 16, 128>}, {pipeline_mode = #tpu.pipeline_mode<synchronous>, transform_indices = @transform_1, window_bounds = array<i64: 384, 128>}, {pipeline_mode = #tpu.pipeline_mode<synchronous>, transform_indices = @transform_2, window_bounds = array<i64: 1, 128>}, {pipeline_mode = #tpu.pipeline_mode<synchronous>, transform_indices = @transform_3, window_bounds = array<i64: 384, 128>}, {pipeline_mode = #tpu.pipeline_mode<synchronous>, transform_indices = @transform_4, window_bounds = array<i64: 1, 128>}, {pipeline_mode = #tpu.pipeline_mode<synchronous>, transform_indices = @transform_5, window_bounds = array<i64: 384, 128>}, {pipeline_mode = #tpu.pipeline_mode<synchronous>, transform_indices = @transform_6, window_bounds = array<i64: 1, 128>}, {pipeline_mode = #tpu.pipeline_mode<synchronous>, transform_indices = @transform_7, window_bounds = array<i64: 128, 8>}, {pipeline_mode = #tpu.pipeline_mode<synchronous>, transform_indices = @transform_8, window_bounds = array<i64: 16, 8>}, {pipeline_mode = #tpu.pipeline_mode<synchronous>, transform_indices = @transform_9, window_bounds = array<i64: 1, 2>}, {transform_indices = @transform_10, window_bounds = array<i64: 2, 2>}]} {
    %cst = arith.constant 0.000000e+00 : f32
    %0 = vector.broadcast %cst : f32 to vector<4x2x128xf32>
    %c0 = arith.constant 0 : index
    %c6 = arith.constant 6 : index
    %c0_0 = arith.constant 0 : index
    %1 = vector.load %arg12[%c0, %c6, %c0_0] : memref<4x32x128xf32, #tpu.memory_space<vmem>>, vector<4x2x128xf32>
    tpu.vector_store %arg12[%c0, %c6, %c0_0], %0 {strides = array<i32>} : memref<4x32x128xf32, #tpu.memory_space<vmem>>, vector<4x2x128xf32>,
    %c0_1 = arith.constant 0 : index
    %c24 = arith.constant 24 : index
    %c0_2 = arith.constant 0 : index
    %2 = vector.load %arg12[%c0_1, %c24, %c0_2] : memref<4x32x128xf32, #tpu.memory_space<vmem>>, vector<4x2x128xf32>
    tpu.vector_store %arg12[%c0_1, %c24, %c0_2], %0 {strides = array<i32>} : memref<4x32x128xf32, #tpu.memory_space<vmem>>, vector<4x2x128xf32>,
    %c0_3 = arith.constant 0 : index
    %c0_4 = arith.constant 0 : index
    %c0_5 = arith.constant 0 : index
    %c0_6 = arith.constant 0 : index
    %3 = vector.load %arg1[%c0_3, %c0_4, %c0_5, %c0_6] : memref<2x2x16x128xf32, #tpu.memory_space<vmem>>, vector<2x2x16x128xf32>
    %4 = vector.shape_cast %3 : vector<2x2x16x128xf32> to vector<4x16x128xf32>
    %c0_7 = arith.constant 0 : index
    %c8 = arith.constant 8 : index
    %c0_8 = arith.constant 0 : index
    %5 = vector.load %arg12[%c0_7, %c8, %c0_8] : memref<4x32x128xf32, #tpu.memory_space<vmem>>, vector<4x16x128xf32>
    tpu.vector_store %arg12[%c0_7, %c8, %c0_8], %4 {strides = array<i32>} : memref<4x32x128xf32, #tpu.memory_space<vmem>>, vector<4x16x128xf32>,
    %c0_9 = arith.constant 0 : index
    %c6_10 = arith.constant 6 : index
    %c0_11 = arith.constant 0 : index
    %6 = vector.load %arg12[%c0_9, %c6_10, %c0_11] : memref<4x32x128xf32, #tpu.memory_space<vmem>>, vector<4x16x128xf32>
    %c0_12 = arith.constant 0 : index
    %c0_13 = arith.constant 0 : index
    %c0_14 = arith.constant 0 : index
    %7 = vector.load %arg13[%c0_12, %c0_13, %c0_14] : memref<4x16x384xf32, #tpu.memory_space<vmem>>, vector<4x16x128xf32>
    tpu.vector_store %arg13[%c0_12, %c0_13, %c0_14], %6 {strides = array<i32>} : memref<4x16x384xf32, #tpu.memory_space<vmem>>, vector<4x16x128xf32>,
    %c0_15 = arith.constant 0 : index
    %c8_16 = arith.constant 8 : index
    %c0_17 = arith.constant 0 : index
    %8 = vector.load %arg12[%c0_15, %c8_16, %c0_17] : memref<4x32x128xf32, #tpu.memory_space<vmem>>, vector<4x16x128xf32>
    %c0_18 = arith.constant 0 : index
    %c0_19 = arith.constant 0 : index
    %c128 = arith.constant 128 : index
    %9 = vector.load %arg13[%c0_18, %c0_19, %c128] : memref<4x16x384xf32, #tpu.memory_space<vmem>>, vector<4x16x128xf32>
    tpu.vector_store %arg13[%c0_18, %c0_19, %c128], %8 {strides = array<i32>} : memref<4x16x384xf32, #tpu.memory_space<vmem>>, vector<4x16x128xf32>,
    %c0_20 = arith.constant 0 : index
    %c10 = arith.constant 10 : index
    %c0_21 = arith.constant 0 : index
    %10 = vector.load %arg12[%c0_20, %c10, %c0_21] : memref<4x32x128xf32, #tpu.memory_space<vmem>>, vector<4x16x128xf32>
    %c0_22 = arith.constant 0 : index
    %c0_23 = arith.constant 0 : index
    %c256 = arith.constant 256 : index
    %11 = vector.load %arg13[%c0_22, %c0_23, %c256] : memref<4x16x384xf32, #tpu.memory_space<vmem>>, vector<4x16x128xf32>
    tpu.vector_store %arg13[%c0_22, %c0_23, %c256], %10 {strides = array<i32>} : memref<4x16x384xf32, #tpu.memory_space<vmem>>, vector<4x16x128xf32>,
    %c0_24 = arith.constant 0 : index
    %c0_25 = arith.constant 0 : index
    %c0_26 = arith.constant 0 : index
    %12 = vector.load %arg13[%c0_24, %c0_25, %c0_26] : memref<4x16x384xf32, #tpu.memory_space<vmem>>, vector<4x16x384xf32>
    %13 = vector.shape_cast %12 : vector<4x16x384xf32> to vector<64x384xf32>
    %c0_27 = arith.constant 0 : index
    %c0_28 = arith.constant 0 : index
    %14 = vector.load %arg2[%c0_27, %c0_28] : memref<384x128xf32, #tpu.memory_space<vmem>>, vector<384x128xf32>
    %cst_29 = arith.constant dense<0.000000e+00> : vector<64x128xf32>
    %15 = tpu.matmul %13, %14, %cst_29 {dimension_numbers = #tpu.dot_dimension_numbers<[1], [0], [0], [1], [0, 0, 1, 1], [], []>} : vector<64x384xf32>, vector<384x128xf32>, vector<64x128xf32> -> vector<64x128xf32>
    %c0_30 = arith.constant 0 : index
    %c0_31 = arith.constant 0 : index
    %16 = vector.load %arg3[%c0_30, %c0_31] : memref<1x128xf32, #tpu.memory_space<vmem>>, vector<1x128xf32>
    %17 = vector.broadcast %16 : vector<1x128xf32> to vector<64x128xf32>
    %18 = arith.addf %15, %17 : vector<64x128xf32>
    %cst_32 = arith.constant 0.000000e+00 : f32
    %19 = vector.broadcast %cst_32 : f32 to vector<64x128xf32>
    %20 = arith.maximumf %18, %19 : vector<64x128xf32>
    %21 = vector.shape_cast %20 : vector<64x128xf32> to vector<4x16x128xf32>
    %c0_33 = arith.constant 0 : index
    %c8_34 = arith.constant 8 : index
    %c0_35 = arith.constant 0 : index
    %22 = vector.load %arg12[%c0_33, %c8_34, %c0_35] : memref<4x32x128xf32, #tpu.memory_space<vmem>>, vector<4x16x128xf32>
    tpu.vector_store %arg12[%c0_33, %c8_34, %c0_35], %21 {strides = array<i32>} : memref<4x32x128xf32, #tpu.memory_space<vmem>>, vector<4x16x128xf32>,
    %c0_36 = arith.constant 0 : index
    %c6_37 = arith.constant 6 : index
    %c0_38 = arith.constant 0 : index
    %23 = vector.load %arg12[%c0_36, %c6_37, %c0_38] : memref<4x32x128xf32, #tpu.memory_space<vmem>>, vector<4x16x128xf32>
    %c0_39 = arith.constant 0 : index
    %c0_40 = arith.constant 0 : index
    %c0_41 = arith.constant 0 : index
    %24 = vector.load %arg13[%c0_39, %c0_40, %c0_41] : memref<4x16x384xf32, #tpu.memory_space<vmem>>, vector<4x16x128xf32>
    tpu.vector_store %arg13[%c0_39, %c0_40, %c0_41], %23 {strides = array<i32>} : memref<4x16x384xf32, #tpu.memory_space<vmem>>, vector<4x16x128xf32>,
    %c0_42 = arith.constant 0 : index
    %c8_43 = arith.constant 8 : index
    %c0_44 = arith.constant 0 : index
    %25 = vector.load %arg12[%c0_42, %c8_43, %c0_44] : memref<4x32x128xf32, #tpu.memory_space<vmem>>, vector<4x16x128xf32>
    %c0_45 = arith.constant 0 : index
    %c0_46 = arith.constant 0 : index
    %c128_47 = arith.constant 128 : index
    %26 = vector.load %arg13[%c0_45, %c0_46, %c128_47] : memref<4x16x384xf32, #tpu.memory_space<vmem>>, vector<4x16x128xf32>
    tpu.vector_store %arg13[%c0_45, %c0_46, %c128_47], %25 {strides = array<i32>} : memref<4x16x384xf32, #tpu.memory_space<vmem>>, vector<4x16x128xf32>,
    %c0_48 = arith.constant 0 : index
    %c10_49 = arith.constant 10 : index
    %c0_50 = arith.constant 0 : index
    %27 = vector.load %arg12[%c0_48, %c10_49, %c0_50] : memref<4x32x128xf32, #tpu.memory_space<vmem>>, vector<4x16x128xf32>
    %c0_51 = arith.constant 0 : index
    %c0_52 = arith.constant 0 : index
    %c256_53 = arith.constant 256 : index
    %28 = vector.load %arg13[%c0_51, %c0_52, %c256_53] : memref<4x16x384xf32, #tpu.memory_space<vmem>>, vector<4x16x128xf32>
    tpu.vector_store %arg13[%c0_51, %c0_52, %c256_53], %27 {strides = array<i32>} : memref<4x16x384xf32, #tpu.memory_space<vmem>>, vector<4x16x128xf32>,
    %c0_54 = arith.constant 0 : index
    %c0_55 = arith.constant 0 : index
    %c0_56 = arith.constant 0 : index
    %29 = vector.load %arg13[%c0_54, %c0_55, %c0_56] : memref<4x16x384xf32, #tpu.memory_space<vmem>>, vector<4x16x384xf32>
    %30 = vector.shape_cast %29 : vector<4x16x384xf32> to vector<64x384xf32>
    %c0_57 = arith.constant 0 : index
    %c0_58 = arith.constant 0 : index
    %31 = vector.load %arg4[%c0_57, %c0_58] : memref<384x128xf32, #tpu.memory_space<vmem>>, vector<384x128xf32>
    %cst_59 = arith.constant dense<0.000000e+00> : vector<64x128xf32>
    %32 = tpu.matmul %30, %31, %cst_59 {dimension_numbers = #tpu.dot_dimension_numbers<[1], [0], [0], [1], [0, 0, 1, 1], [], []>} : vector<64x384xf32>, vector<384x128xf32>, vector<64x128xf32> -> vector<64x128xf32>
    %c0_60 = arith.constant 0 : index
    %c0_61 = arith.constant 0 : index
    %33 = vector.load %arg5[%c0_60, %c0_61] : memref<1x128xf32, #tpu.memory_space<vmem>>, vector<1x128xf32>
    %34 = vector.broadcast %33 : vector<1x128xf32> to vector<64x128xf32>
    %35 = arith.addf %32, %34 : vector<64x128xf32>
    %cst_62 = arith.constant 0.000000e+00 : f32
    %36 = vector.broadcast %cst_62 : f32 to vector<64x128xf32>
    %37 = arith.maximumf %35, %36 : vector<64x128xf32>
    %38 = vector.shape_cast %37 : vector<64x128xf32> to vector<2x2x16x128xf32>
    %39 = vector.extract_strided_slice %38 {offsets = [1, 0, 0, 0], sizes = [1, 2, 16, 128], strides = [1, 1, 1, 1]} : vector<2x2x16x128xf32> to vector<1x2x16x128xf32>
    %40 = vector.shape_cast %39 : vector<1x2x16x128xf32> to vector<2x16x128xf32>
    %41 = vector.extract_strided_slice %38 {offsets = [0, 0, 0, 0], sizes = [1, 2, 16, 128], strides = [1, 1, 1, 1]} : vector<2x2x16x128xf32> to vector<1x2x16x128xf32>
    %42 = vector.shape_cast %41 : vector<1x2x16x128xf32> to vector<2x16x128xf32>
    %43 = arith.subf %40, %42 : vector<2x16x128xf32>
    %44 = math.absf %43 : vector<2x16x128xf32>
    %c0_63 = arith.constant 0 : index
    %c8_64 = arith.constant 8 : index
    %c0_65 = arith.constant 0 : index
    %45 = vector.load %arg12[%c0_63, %c8_64, %c0_65] : memref<4x32x128xf32, #tpu.memory_space<vmem>>, vector<2x16x128xf32>
    tpu.vector_store %arg12[%c0_63, %c8_64, %c0_65], %44 {strides = array<i32>} : memref<4x32x128xf32, #tpu.memory_space<vmem>>, vector<2x16x128xf32>,
    %c0_66 = arith.constant 0 : index
    %c7 = arith.constant 7 : index
    %c0_67 = arith.constant 0 : index
    %46 = vector.load %arg12[%c0_66, %c7, %c0_67] : memref<4x32x128xf32, #tpu.memory_space<vmem>>, vector<2x16x128xf32>
    %c0_68 = arith.constant 0 : index
    %c0_69 = arith.constant 0 : index
    %c0_70 = arith.constant 0 : index
    %47 = vector.load %arg13[%c0_68, %c0_69, %c0_70] : memref<4x16x384xf32, #tpu.memory_space<vmem>>, vector<2x16x128xf32>
    tpu.vector_store %arg13[%c0_68, %c0_69, %c0_70], %46 {strides = array<i32>} : memref<4x16x384xf32, #tpu.memory_space<vmem>>, vector<2x16x128xf32>,
    %c0_71 = arith.constant 0 : index
    %c8_72 = arith.constant 8 : index
    %c0_73 = arith.constant 0 : index
    %48 = vector.load %arg12[%c0_71, %c8_72, %c0_73] : memref<4x32x128xf32, #tpu.memory_space<vmem>>, vector<2x16x128xf32>
    %c0_74 = arith.constant 0 : index
    %c0_75 = arith.constant 0 : index
    %c128_76 = arith.constant 128 : index
    %49 = vector.load %arg13[%c0_74, %c0_75, %c128_76] : memref<4x16x384xf32, #tpu.memory_space<vmem>>, vector<2x16x128xf32>
    tpu.vector_store %arg13[%c0_74, %c0_75, %c128_76], %48 {strides = array<i32>} : memref<4x16x384xf32, #tpu.memory_space<vmem>>, vector<2x16x128xf32>,
    %c0_77 = arith.constant 0 : index
    %c9 = arith.constant 9 : index
    %c0_78 = arith.constant 0 : index
    %50 = vector.load %arg12[%c0_77, %c9, %c0_78] : memref<4x32x128xf32, #tpu.memory_space<vmem>>, vector<2x16x128xf32>
    %c0_79 = arith.constant 0 : index
    %c0_80 = arith.constant 0 : index
    %c256_81 = arith.constant 256 : index
    %51 = vector.load %arg13[%c0_79, %c0_80, %c256_81] : memref<4x16x384xf32, #tpu.memory_space<vmem>>, vector<2x16x128xf32>
    tpu.vector_store %arg13[%c0_79, %c0_80, %c256_81], %50 {strides = array<i32>} : memref<4x16x384xf32, #tpu.memory_space<vmem>>, vector<2x16x128xf32>,
    %c0_82 = arith.constant 0 : index
    %c0_83 = arith.constant 0 : index
    %c0_84 = arith.constant 0 : index
    %52 = vector.load %arg13[%c0_82, %c0_83, %c0_84] : memref<4x16x384xf32, #tpu.memory_space<vmem>>, vector<2x16x384xf32>
    %53 = vector.shape_cast %52 : vector<2x16x384xf32> to vector<32x384xf32>
    %c0_85 = arith.constant 0 : index
    %c0_86 = arith.constant 0 : index
    %54 = vector.load %arg6[%c0_85, %c0_86] : memref<384x128xf32, #tpu.memory_space<vmem>>, vector<384x128xf32>
    %cst_87 = arith.constant dense<0.000000e+00> : vector<32x128xf32>
    %55 = tpu.matmul %53, %54, %cst_87 {dimension_numbers = #tpu.dot_dimension_numbers<[1], [0], [0], [1], [0, 0, 1, 1], [], []>} : vector<32x384xf32>, vector<384x128xf32>, vector<32x128xf32> -> vector<32x128xf32>
    %c0_88 = arith.constant 0 : index
    %c0_89 = arith.constant 0 : index
    %56 = vector.load %arg7[%c0_88, %c0_89] : memref<1x128xf32, #tpu.memory_space<vmem>>, vector<1x128xf32>
    %57 = vector.broadcast %56 : vector<1x128xf32> to vector<32x128xf32>
    %58 = arith.addf %55, %57 : vector<32x128xf32>
    %cst_90 = arith.constant 0.000000e+00 : f32
    %59 = vector.broadcast %cst_90 : f32 to vector<32x128xf32>
    %60 = arith.maximumf %58, %59 : vector<32x128xf32>
    %c0_91 = arith.constant 0 : index
    %c0_92 = arith.constant 0 : index
    %61 = vector.load %arg8[%c0_91, %c0_92] : memref<128x8xf32, #tpu.memory_space<vmem>>, vector<128x8xf32>
    %cst_93 = arith.constant dense<0.000000e+00> : vector<32x8xf32>
    %62 = tpu.matmul %60, %61, %cst_93 {dimension_numbers = #tpu.dot_dimension_numbers<[1], [0], [0], [1], [0, 0, 1, 1], [], []>} : vector<32x128xf32>, vector<128x8xf32>, vector<32x8xf32> -> vector<32x8xf32>
    %63 = vector.shape_cast %62 : vector<32x8xf32> to vector<2x16x8xf32>
    %c0_94 = arith.constant 0 : index
    %c0_95 = arith.constant 0 : index
    %64 = vector.load %arg9[%c0_94, %c0_95] : memref<16x8xf32, #tpu.memory_space<vmem>>, vector<16x8xf32>
    %65 = vector.shape_cast %64 : vector<16x8xf32> to vector<1x16x8xf32>
    %66 = vector.broadcast %65 : vector<1x16x8xf32> to vector<2x16x8xf32>
    %67 = arith.mulf %63, %66 : vector<2x16x8xf32>
    %cst_96 = arith.constant dense<0.000000e+00> : vector<2x8xf32>
    %68 = vector.multi_reduction <add>, %67, %cst_96 [1] : vector<2x16x8xf32> to vector<2x8xf32>
    %69 = vector.extract_strided_slice %68 {offsets = [0, 0], sizes = [2, 2], strides = [1, 1]} : vector<2x8xf32> to vector<2x2xf32>
    %70 = vector.extract_strided_slice %68 {offsets = [0, 2], sizes = [2, 2], strides = [1, 1]} : vector<2x8xf32> to vector<2x2xf32>
    %71 = arith.addf %69, %70 : vector<2x2xf32>
    %72 = vector.extract_strided_slice %68 {offsets = [0, 4], sizes = [2, 2], strides = [1, 1]} : vector<2x8xf32> to vector<2x2xf32>
    %73 = arith.addf %71, %72 : vector<2x2xf32>
    %74 = vector.extract_strided_slice %68 {offsets = [0, 6], sizes = [2, 2], strides = [1, 1]} : vector<2x8xf32> to vector<2x2xf32>
    %75 = arith.addf %73, %74 : vector<2x2xf32>
    %c0_97 = arith.constant 0 : index
    %c0_98 = arith.constant 0 : index
    %76 = vector.load %arg10[%c0_97, %c0_98] : memref<1x2xf32, #tpu.memory_space<vmem>>, vector<1x2xf32>
    %77 = vector.broadcast %76 : vector<1x2xf32> to vector<2x2xf32>
    %78 = arith.addf %75, %77 : vector<2x2xf32>
    %c0_99 = arith.constant 0 : index
    %c0_100 = arith.constant 0 : index
    %79 = vector.load %arg11[%c0_99, %c0_100] : memref<2x2xf32, #tpu.memory_space<vmem>>, vector<2x2xf32>
    tpu.vector_store %arg11[%c0_99, %c0_100], %78 {strides = array<i32>} : memref<2x2xf32, #tpu.memory_space<vmem>>, vector<2x2xf32>,
    return
  }
  func.func @transform_0(%arg0: i32) -> (i32, i32, i32, i32) {
    %c0_i32 = arith.constant 0 : i32
    %c0_i32_0 = arith.constant 0 : i32
    %c0_i32_1 = arith.constant 0 : i32
    %c0_i32_2 = arith.constant 0 : i32
    return %c0_i32, %arg0, %c0_i32_0, %c0_i32_1 : i32, i32, i32, i32
  }
  func.func @transform_1(%arg0: i32) -> (i32, i32) {
    %c0_i32 = arith.constant 0 : i32
    %c0_i32_0 = arith.constant 0 : i32
    %c0_i32_1 = arith.constant 0 : i32
    return %c0_i32, %c0_i32_0 : i32, i32
  }
  func.func @transform_2(%arg0: i32) -> (i32, i32) {
    %c0_i32 = arith.constant 0 : i32
    %c0_i32_0 = arith.constant 0 : i32
    %c0_i32_1 = arith.constant 0 : i32
    return %c0_i32, %c0_i32_0 : i32, i32
  }
  func.func @transform_3(%arg0: i32) -> (i32, i32) {
    %c0_i32 = arith.constant 0 : i32
    %c0_i32_0 = arith.constant 0 : i32
    %c0_i32_1 = arith.constant 0 : i32
    return %c0_i32, %c0_i32_0 : i32, i32
  }
  func.func @transform_4(%arg0: i32) -> (i32, i32) {
    %c0_i32 = arith.constant 0 : i32
    %c0_i32_0 = arith.constant 0 : i32
    %c0_i32_1 = arith.constant 0 : i32
    return %c0_i32, %c0_i32_0 : i32, i32
  }
  func.func @transform_5(%arg0: i32) -> (i32, i32) {
    %c0_i32 = arith.constant 0 : i32
    %c0_i32_0 = arith.constant 0 : i32
    %c0_i32_1 = arith.constant 0 : i32
    return %c0_i32, %c0_i32_0 : i32, i32
  }
  func.func @transform_6(%arg0: i32) -> (i32, i32) {
    %c0_i32 = arith.constant 0 : i32
    %c0_i32_0 = arith.constant 0 : i32
    %c0_i32_1 = arith.constant 0 : i32
    return %c0_i32, %c0_i32_0 : i32, i32
  }
  func.func @transform_7(%arg0: i32) -> (i32, i32) {
    %c0_i32 = arith.constant 0 : i32
    %c0_i32_0 = arith.constant 0 : i32
    %c0_i32_1 = arith.constant 0 : i32
    return %c0_i32, %c0_i32_0 : i32, i32
  }
  func.func @transform_8(%arg0: i32) -> (i32, i32) {
    %c0_i32 = arith.constant 0 : i32
    %c0_i32_0 = arith.constant 0 : i32
    %c0_i32_1 = arith.constant 0 : i32
    return %c0_i32, %c0_i32_0 : i32, i32
  }
  func.func @transform_9(%arg0: i32) -> (i32, i32) {
    %c0_i32 = arith.constant 0 : i32
    %c0_i32_0 = arith.constant 0 : i32
    %c0_i32_1 = arith.constant 0 : i32
    return %c0_i32, %c0_i32_0 : i32, i32
  }
  func.func @transform_10(%arg0: i32) -> (i32, i32) {
    %c0_i32 = arith.constant 0 : i32
    %c0_i32_0 = arith.constant 0 : i32
    return %arg0, %c0_i32 : i32, i32
  }
}

</mosaic_0001>

<llo_original>
// kernel: tpu_custom_call.1
$region0: #{tpu_custom_call.1}
  #allocation0 [shape = 'u32[]', space=smem, size = 0x4, offset = 0x4, fixed_abs, tag = 'smem constant byte address 0x4 - core index']
  #allocation1 [shape = 'u32[144,128]{1,0:T(1,128)}', space=vmem, size = 0x12000, scoped, tag = 'internal scratch']
  #allocation2 [shape = 'f32[4,32,128]{2,1,0:T(8,128)}', space=vmem, size = 0x10000, scoped, tag = 'scratch operand']
  #allocation3 [shape = 'f32[4,16,384]{2,1,0:T(8,128)}', space=vmem, size = 0x18000, scoped, tag = 'scratch operand']
  %s0 = inlined_call_operand.vmem [shape: f32[2,2,16,128], index: 0, kind: input, shape index: {}]
  %s1 = inlined_call_operand.hbm [shape: f32[384,128], index: 1, kind: input, shape index: {}]
  %s2 = inlined_call_operand.vmem [shape: f32[1,128], index: 2, kind: input, shape index: {}]
  %s3 = inlined_call_operand.hbm [shape: f32[384,128], index: 3, kind: input, shape index: {}]
  %s4 = inlined_call_operand.vmem [shape: f32[1,128], index: 4, kind: input, shape index: {}]
  %s5 = inlined_call_operand.hbm [shape: f32[384,128], index: 5, kind: input, shape index: {}]
  %s6 = inlined_call_operand.vmem [shape: f32[1,128], index: 6, kind: input, shape index: {}]
  %s7 = inlined_call_operand.vmem [shape: f32[128,8], index: 7, kind: input, shape index: {}]
  %s8 = inlined_call_operand.vmem [shape: f32[16,8], index: 8, kind: input, shape index: {}]
  %s9 = inlined_call_operand.vmem [shape: f32[1,2], index: 9, kind: input, shape index: {}]
  %s10 = inlined_call_operand.hbm [shape: f32[2,2], index: 10, kind: output, shape index: {}]
  %s11 = sld [smem:[#allocation0]]
  $region62: #{tpu_custom_call.1} parent=0
    _
  %s13 = ssub.s32 1, %s11
  %s14 = scalar_select 0, %s13, %s11
  $region1: #{tpu_custom_call.1} parent=0
    #allocation4 [shape = 'u8[196608]{0}', space=vmem, size = 0x30000, scoped, tag = 'input window, operand 1, single buffered']
    #allocation5 [shape = 's32[1]{0}', space=sflag, size = 0x4, scoped, tag = 'scoped memory for tpu_custom_call.1']
    #allocation6 [shape = 's32[1]{0}', space=sflag, size = 0x4, scoped, tag = 'scoped memory for tpu_custom_call.1']
    #allocation7 [shape = 'u8[196608]{0}', space=vmem, size = 0x30000, scoped, tag = 'input window, operand 3, single buffered']
    #allocation8 [shape = 's32[1]{0}', space=sflag, size = 0x4, scoped, tag = 'scoped memory for tpu_custom_call.1']
    #allocation9 [shape = 'u8[196608]{0}', space=vmem, size = 0x30000, scoped, tag = 'input window, operand 5, single buffered']
    #allocation10 [shape = 'u8[1024]{0}', space=vmem, size = 0x400, scoped, tag = 'output window, operand 0, single buffered']
    %15 = vsyncpa [#allocation5], 0
    %16 = vsyncpa [#allocation8], 0
    %17 = vsyncpa [#allocation6], 0
    // Predicated region
    $region2: #{tpu_custom_call.1} parent=1 // pred_check
      _
    $region3: #{tpu_custom_call.1} parent=1 // pred_check_branch
      %19 = sbr.rel (0) target = $region5
    $region4: #{tpu_custom_call.1} parent=1 // pred_region
      _
    $region5: #{tpu_custom_call.1} parent=1 // pred_fallthru
      _
    // Predicated region
    $region6: #{tpu_custom_call.1} parent=1 // pred_check
      _
    $region7: #{tpu_custom_call.1} parent=1 // pred_check_branch
      %21 = sbr.rel (0) target = $region9
    $region8: #{tpu_custom_call.1} parent=1 // pred_region
      %s23 = ssub.s32 6144, 6144
      %24 = vsyncadd [#allocation5], %s23
      %s25 = sshll.u32 [#allocation4], 4
      %s26 = int_to_ptr.vmem [resolvable:$true] %s25
      %31 = dma.hbm_to_vmem [thread:$0]  %s1, 6144, %s26, [#allocation5], 128, 128, 8
    $region9: #{tpu_custom_call.1} parent=1 // pred_fallthru
      _
    // Predicated region
    $region10: #{tpu_custom_call.1} parent=1 // pred_check
      _
    $region11: #{tpu_custom_call.1} parent=1 // pred_check_branch
      %33 = sbr.rel (0) target = $region13
    $region12: #{tpu_custom_call.1} parent=1 // pred_region
      _
    $region13: #{tpu_custom_call.1} parent=1 // pred_fallthru
      _
    // Predicated region
    $region14: #{tpu_custom_call.1} parent=1 // pred_check
      _
    $region15: #{tpu_custom_call.1} parent=1 // pred_check_branch
      %35 = sbr.rel (0) target = $region17
    $region16: #{tpu_custom_call.1} parent=1 // pred_region
      %s37 = ssub.s32 6144, 6144
      %38 = vsyncadd [#allocation8], %s37
      %s39 = sshll.u32 [#allocation7], 4
      %s40 = int_to_ptr.vmem [resolvable:$true] %s39
      %45 = dma.hbm_to_vmem [thread:$0]  %s3, 6144, %s40, [#allocation8], 128, 128, 8
    $region17: #{tpu_custom_call.1} parent=1 // pred_fallthru
      _
    // Predicated region
    $region18: #{tpu_custom_call.1} parent=1 // pred_check
      _
    $region19: #{tpu_custom_call.1} parent=1 // pred_check_branch
      %47 = sbr.rel (0) target = $region21
    $region20: #{tpu_custom_call.1} parent=1 // pred_region
      _
    $region21: #{tpu_custom_call.1} parent=1 // pred_fallthru
      _
    // Predicated region
    $region22: #{tpu_custom_call.1} parent=1 // pred_check
      _
    $region23: #{tpu_custom_call.1} parent=1 // pred_check_branch
      %49 = sbr.rel (0) target = $region25
    $region24: #{tpu_custom_call.1} parent=1 // pred_region
      %s51 = ssub.s32 6144, 6144
      %52 = vsyncadd [#allocation8], %s51
      %s53 = sshll.u32 [#allocation9], 4
      %s54 = int_to_ptr.vmem [resolvable:$true] %s53
      %59 = dma.hbm_to_vmem [thread:$0]  %s5, 6144, %s54, [#allocation8], 128, 128, 8
    $region25: #{tpu_custom_call.1} parent=1 // pred_fallthru
      _
    // Predicated region
    $region26: #{tpu_custom_call.1} parent=1 // pred_check
      _
    $region27: #{tpu_custom_call.1} parent=1 // pred_check_branch
      %61 = sbr.rel (0) target = $region29
    $region28: #{tpu_custom_call.1} parent=1 // pred_region
      _
    $region29: #{tpu_custom_call.1} parent=1 // pred_fallthru
      _
    // Predicated region
    $region30: #{tpu_custom_call.1} parent=1 // pred_check
      _
    $region31: #{tpu_custom_call.1} parent=1 // pred_check_branch
      %63 = sbr.rel (0) target = $region33
    $region32: #{tpu_custom_call.1} parent=1 // pred_region
      _
    $region33: #{tpu_custom_call.1} parent=1 // pred_fallthru
      _
    // Predicated region
    $region34: #{tpu_custom_call.1} parent=1 // pred_check
      _
    $region35: #{tpu_custom_call.1} parent=1 // pred_check_branch
      %65 = sbr.rel (0) target = $region37
    $region36: #{tpu_custom_call.1} parent=1 // pred_region
      _
    $region37: #{tpu_custom_call.1} parent=1 // pred_fallthru
      _
    // Predicated region
    $region38: #{tpu_custom_call.1} parent=1 // pred_check
      _
    $region39: #{tpu_custom_call.1} parent=1 // pred_check_branch
      %67 = sbr.rel (0) target = $region41
    $region40: #{tpu_custom_call.1} parent=1 // pred_region
      _
    $region41: #{tpu_custom_call.1} parent=1 // pred_fallthru
      _
    // Predicated region
    $region42: #{tpu_custom_call.1} parent=1 // pred_check
      _
    $region43: #{tpu_custom_call.1} parent=1 // pred_check_branch
      %69 = sbr.rel (0) target = $region45
    $region44: #{tpu_custom_call.1} parent=1 // pred_region
      %70 = dma.done [#allocation5], 6144
    $region45: #{tpu_custom_call.1} parent=1 // pred_fallthru
      _
    // Predicated region
    $region46: #{tpu_custom_call.1} parent=1 // pred_check
      _
    $region47: #{tpu_custom_call.1} parent=1 // pred_check_branch
      %72 = sbr.rel (0) target = $region49
    $region48: #{tpu_custom_call.1} parent=1 // pred_region
      %73 = dma.done [#allocation8], 6144
    $region49: #{tpu_custom_call.1} parent=1 // pred_fallthru
      _
    // Predicated region
    $region50: #{tpu_custom_call.1} parent=1 // pred_check
      _
    $region51: #{tpu_custom_call.1} parent=1 // pred_check_branch
      %75 = sbr.rel (0) target = $region53
    $region52: #{tpu_custom_call.1} parent=1 // pred_region
      %76 = dma.done [#allocation8], 6144
    $region53: #{tpu_custom_call.1} parent=1 // pred_fallthru
      _
    %77 = vst [vmem:[#allocation2 + $0x6] sm:$0x3] 0.0
    %78 = vst [vmem:[#allocation2 + $0x26] sm:$0x3] 0.0
    %79 = vst [vmem:[#allocation2 + $0x46] sm:$0x3] 0.0
    %80 = vst [vmem:[#allocation2 + $0x66] sm:$0x3] 0.0
    %81 = vst [vmem:[#allocation2 + $0x18] sm:$0x3] 0.0
    %82 = vst [vmem:[#allocation2 + $0x38] sm:$0x3] 0.0
    %83 = vst [vmem:[#allocation2 + $0x58] sm:$0x3] 0.0
    %84 = vst [vmem:[#allocation2 + $0x78] sm:$0x3] 0.0
    %v85 = vld [vmem:[%s0] sm:$0xff]
    %v86 = vld [vmem:[%s0 + $0x8] sm:$0xff]
    %v87 = vld [vmem:[%s0 + $0x10] sm:$0xff]
    %v88 = vld [vmem:[%s0 + $0x18] sm:$0xff]
    %v89 = vld [vmem:[%s0 + $0x20] sm:$0xff]
    %v90 = vld [vmem:[%s0 + $0x28] sm:$0xff]
    %v91 = vld [vmem:[%s0 + $0x30] sm:$0xff]
    %v92 = vld [vmem:[%s0 + $0x38] sm:$0xff]
    %93 = vst [vmem:[#allocation2 + $0x8] sm:$0xff] %v85
    %94 = vst [vmem:[#allocation2 + $0x10] sm:$0xff] %v86
    %95 = vst [vmem:[#allocation2 + $0x28] sm:$0xff] %v87
    %96 = vst [vmem:[#allocation2 + $0x30] sm:$0xff] %v88
    %97 = vst [vmem:[#allocation2 + $0x48] sm:$0xff] %v89
    %98 = vst [vmem:[#allocation2 + $0x50] sm:$0xff] %v90
    %99 = vst [vmem:[#allocation2 + $0x68] sm:$0xff] %v91
    %100 = vst [vmem:[#allocation2 + $0x70] sm:$0xff] %v92
    %v101 = vld [vmem:[#allocation2 + $0x6] sm:$0xff]
    %v102 = vld [vmem:[#allocation2 + $0xe] sm:$0xff]
    %v103 = vld [vmem:[#allocation2 + $0x26] sm:$0xff]
    %v104 = vld [vmem:[#allocation2 + $0x2e] sm:$0xff]
    %v105 = vld [vmem:[#allocation2 + $0x46] sm:$0xff]
    %v106 = vld [vmem:[#allocation2 + $0x4e] sm:$0xff]
    %v107 = vld [vmem:[#allocation2 + $0x66] sm:$0xff]
    %v108 = vld [vmem:[#allocation2 + $0x6e] sm:$0xff]
    %109 = vst [vmem:[#allocation3] sm:$0xff] %v101
    %110 = vst [vmem:[#allocation3 + $0x18] sm:$0xff] %v102
    %111 = vst [vmem:[#allocation3 + $0x30] sm:$0xff] %v103
    %112 = vst [vmem:[#allocation3 + $0x48] sm:$0xff] %v104
    %113 = vst [vmem:[#allocation3 + $0x60] sm:$0xff] %v105
    %114 = vst [vmem:[#allocation3 + $0x78] sm:$0xff] %v106
    %115 = vst [vmem:[#allocation3 + $0x90] sm:$0xff] %v107
    %116 = vst [vmem:[#allocation3 + $0xa8] sm:$0xff] %v108
    %v117 = vld [vmem:[#allocation2 + $0x8] sm:$0xff]
    %v118 = vld [vmem:[#allocation2 + $0x10] sm:$0xff]
    %v119 = vld [vmem:[#allocation2 + $0x28] sm:$0xff]
    %v120 = vld [vmem:[#allocation2 + $0x30] sm:$0xff]
    %v121 = vld [vmem:[#allocation2 + $0x48] sm:$0xff]
    %v122 = vld [vmem:[#allocation2 + $0x50] sm:$0xff]
    %v123 = vld [vmem:[#allocation2 + $0x68] sm:$0xff]
    %v124 = vld [vmem:[#allocation2 + $0x70] sm:$0xff]
    %125 = vst [vmem:[#allocation3 + $0x8] sm:$0xff] %v117
    %126 = vst [vmem:[#allocation3 + $0x20] sm:$0xff] %v118
    %127 = vst [vmem:[#allocation3 + $0x38] sm:$0xff] %v119
    %128 = vst [vmem:[#allocation3 + $0x50] sm:$0xff] %v120
    %129 = vst [vmem:[#allocation3 + $0x68] sm:$0xff] %v121
    %130 = vst [vmem:[#allocation3 + $0x80] sm:$0xff] %v122
    %131 = vst [vmem:[#allocation3 + $0x98] sm:$0xff] %v123
    %132 = vst [vmem:[#allocation3 + $0xb0] sm:$0xff] %v124
    %v133 = vld [vmem:[#allocation2 + $0xa] sm:$0xff]
    %v134 = vld [vmem:[#allocation2 + $0x12] sm:$0xff]
    %v135 = vld [vmem:[#allocation2 + $0x2a] sm:$0xff]
    %v136 = vld [vmem:[#allocation2 + $0x32] sm:$0xff]
    %v137 = vld [vmem:[#allocation2 + $0x4a] sm:$0xff]
    %v138 = vld [vmem:[#allocation2 + $0x52] sm:$0xff]
    %v139 = vld [vmem:[#allocation2 + $0x6a] sm:$0xff]
    %v140 = vld [vmem:[#allocation2 + $0x72] sm:$0xff]
    %141 = vst [vmem:[#allocation3 + $0x10] sm:$0xff] %v133
    %142 = vst [vmem:[#allocation3 + $0x28] sm:$0xff] %v134
    %143 = vst [vmem:[#allocation3 + $0x40] sm:$0xff] %v135
    %144 = vst [vmem:[#allocation3 + $0x58] sm:$0xff] %v136
    %145 = vst [vmem:[#allocation3 + $0x70] sm:$0xff] %v137
    %146 = vst [vmem:[#allocation3 + $0x88] sm:$0xff] %v138
    %147 = vst [vmem:[#allocation3 + $0xa0] sm:$0xff] %v139
    %148 = vst [vmem:[#allocation3 + $0xb8] sm:$0xff] %v140
    %v149 = vld [vmem:[#allocation3] sm:$0xff]
    %v150 = vld [vmem:[#allocation3 + $0x8] sm:$0xff]
    %v151 = vld [vmem:[#allocation3 + $0x10] sm:$0xff]
    %v152 = vld [vmem:[#allocation3 + $0x18] sm:$0xff]
    %v153 = vld [vmem:[#allocation3 + $0x20] sm:$0xff]
    %v154 = vld [vmem:[#allocation3 + $0x28] sm:$0xff]
    %v155 = vld [vmem:[#allocation3 + $0x30] sm:$0xff]
    %v156 = vld [vmem:[#allocation3 + $0x38] sm:$0xff]
    %v157 = vld [vmem:[#allocation3 + $0x40] sm:$0xff]
    %v158 = vld [vmem:[#allocation3 + $0x48] sm:$0xff]
    %v159 = vld [vmem:[#allocation3 + $0x50] sm:$0xff]
    %v160 = vld [vmem:[#allocation3 + $0x58] sm:$0xff]
    %v161 = vld [vmem:[#allocation3 + $0x60] sm:$0xff]
    %v162 = vld [vmem:[#allocation3 + $0x68] sm:$0xff]
    %v163 = vld [vmem:[#allocation3 + $0x70] sm:$0xff]
    %v164 = vld [vmem:[#allocation3 + $0x78] sm:$0xff]
    %v165 = vld [vmem:[#allocation3 + $0x80] sm:$0xff]
    %v166 = vld [vmem:[#allocation3 + $0x88] sm:$0xff]
    %v167 = vld [vmem:[#allocation3 + $0x90] sm:$0xff]
    %v168 = vld [vmem:[#allocation3 + $0x98] sm:$0xff]
    %v169 = vld [vmem:[#allocation3 + $0xa0] sm:$0xff]
    %v170 = vld [vmem:[#allocation3 + $0xa8] sm:$0xff]
    %v171 = vld [vmem:[#allocation3 + $0xb0] sm:$0xff]
    %v172 = vld [vmem:[#allocation3 + $0xb8] sm:$0xff]
    %v173 = vld [vmem:[#allocation4] sm:$0xff]
    %v174 = vld [vmem:[#allocation4 + $0x8] sm:$0xff]
    %v175 = vld [vmem:[#allocation4 + $0x10] sm:$0xff]
    %v176 = vld [vmem:[#allocation4 + $0x18] sm:$0xff]
    %v177 = vld [vmem:[#allocation4 + $0x20] sm:$0xff]
    %v178 = vld [vmem:[#allocation4 + $0x28] sm:$0xff]
    %v179 = vld [vmem:[#allocation4 + $0x30] sm:$0xff]
    %v180 = vld [vmem:[#allocation4 + $0x38] sm:$0xff]
    %v181 = vld [vmem:[#allocation4 + $0x40] sm:$0xff]
    %v182 = vld [vmem:[#allocation4 + $0x48] sm:$0xff]
    %v183 = vld [vmem:[#allocation4 + $0x50] sm:$0xff]
    %v184 = vld [vmem:[#allocation4 + $0x58] sm:$0xff]
    %v185 = vld [vmem:[#allocation4 + $0x60] sm:$0xff]
    %v186 = vld [vmem:[#allocation4 + $0x68] sm:$0xff]
    %v187 = vld [vmem:[#allocation4 + $0x70] sm:$0xff]
    %v188 = vld [vmem:[#allocation4 + $0x78] sm:$0xff]
    %v189 = vld [vmem:[#allocation4 + $0x80] sm:$0xff]
    %v190 = vld [vmem:[#allocation4 + $0x88] sm:$0xff]
    %v191 = vld [vmem:[#allocation4 + $0x90] sm:$0xff]
    %v192 = vld [vmem:[#allocation4 + $0x98] sm:$0xff]
    %v193 = vld [vmem:[#allocation4 + $0xa0] sm:$0xff]
    %v194 = vld [vmem:[#allocation4 + $0xa8] sm:$0xff]
    %v195 = vld [vmem:[#allocation4 + $0xb0] sm:$0xff]
    %v196 = vld [vmem:[#allocation4 + $0xb8] sm:$0xff]
    %v197 = vld [vmem:[#allocation4 + $0xc0] sm:$0xff]
    %v198 = vld [vmem:[#allocation4 + $0xc8] sm:$0xff]
    %v199 = vld [vmem:[#allocation4 + $0xd0] sm:$0xff]
    %v200 = vld [vmem:[#allocation4 + $0xd8] sm:$0xff]
    %v201 = vld [vmem:[#allocation4 + $0xe0] sm:$0xff]
    %v202 = vld [vmem:[#allocation4 + $0xe8] sm:$0xff]
    %v203 = vld [vmem:[#allocation4 + $0xf0] sm:$0xff]
    %v204 = vld [vmem:[#allocation4 + $0xf8] sm:$0xff]
    %v205 = vld [vmem:[#allocation4 + $0x100] sm:$0xff]
    %v206 = vld [vmem:[#allocation4 + $0x108] sm:$0xff]
    %v207 = vld [vmem:[#allocation4 + $0x110] sm:$0xff]
    %v208 = vld [vmem:[#allocation4 + $0x118] sm:$0xff]
    %v209 = vld [vmem:[#allocation4 + $0x120] sm:$0xff]
    %v210 = vld [vmem:[#allocation4 + $0x128] sm:$0xff]
    %v211 = vld [vmem:[#allocation4 + $0x130] sm:$0xff]
    %v212 = vld [vmem:[#allocation4 + $0x138] sm:$0xff]
    %v213 = vld [vmem:[#allocation4 + $0x140] sm:$0xff]
    %v214 = vld [vmem:[#allocation4 + $0x148] sm:$0xff]
    %v215 = vld [vmem:[#allocation4 + $0x150] sm:$0xff]
    %v216 = vld [vmem:[#allocation4 + $0x158] sm:$0xff]
    %v217 = vld [vmem:[#allocation4 + $0x160] sm:$0xff]
    %v218 = vld [vmem:[#allocation4 + $0x168] sm:$0xff]
    %v219 = vld [vmem:[#allocation4 + $0x170] sm:$0xff]
    %v220 = vld [vmem:[#allocation4 + $0x178] sm:$0xff]
    %v221 = vld [vmem:[%s2] sm:$0x1]
    %v223 = vlaneseq
    %v224 = vshrl.u32 %v223, 7
    %v225 = vsub.s32 0, %v224
    %v226 = vrot.slane %v221, %v225
    %228 = vmatprep.subr.mxu0 0.0
    %229 = vmatpush1.msra.mxu0 %v173
    %230 = vmatprep.subr.mxu0 0.0
    %231 = vmatpush1.msra.mxu0 %v174
    %232 = vmatprep.subr.mxu0 0.0
    %233 = vmatpush1.msra.mxu0 %v175
    %234 = vmatprep.subr.mxu0 0.0
    %235 = vmatpush1.msra.mxu0 %v176
    %236 = vmatprep.subr.mxu0 0.0
    %237 = vmatpush1.msra.mxu0 %v177
    %238 = vmatprep.subr.mxu0 0.0
    %239 = vmatpush1.msra.mxu0 %v178
    %240 = vmatprep.subr.mxu0 0.0
    %241 = vmatpush1.msra.mxu0 %v179
    %242 = vmatprep.subr.mxu0 0.0
    %243 = vmatpush1.msra.mxu0 %v180
    %244 = vmatprep.subr.mxu0 0.0
    %245 = vmatpush1.msra.mxu0 %v181
    %246 = vmatprep.subr.mxu0 0.0
    %247 = vmatpush1.msra.mxu0 %v182
    %248 = vmatprep.subr.mxu0 0.0
    %249 = vmatpush1.msra.mxu0 %v183
    %250 = vmatprep.subr.mxu0 0.0
    %251 = vmatpush1.msra.mxu0 %v184
    %252 = vmatprep.subr.mxu0 0.0
    %253 = vmatpush1.msra.mxu0 %v185
    %254 = vmatprep.subr.mxu0 0.0
    %255 = vmatpush1.msra.mxu0 %v186
    %256 = vmatprep.subr.mxu0 0.0
    %257 = vmatpush1.msra.mxu0 %v187
    %258 = vmatprep.subr.mxu0 0.0
    %259 = vmatpush1.msra.mxu0 %v188
    %260 = vmatprep.subr.mxu0 0.0
    %261 = vmatpush1.msra.mxu0 %v189
    %262 = vmatprep.subr.mxu0 0.0
    %263 = vmatpush1.msra.mxu0 %v190
    %264 = vmatprep.subr.mxu0 0.0
    %265 = vmatpush1.msra.mxu0 %v191
    %266 = vmatprep.subr.mxu0 0.0
    %267 = vmatpush1.msra.mxu0 %v192
    %268 = vmatprep.subr.mxu0 0.0
    %269 = vmatpush1.msra.mxu0 %v193
    %270 = vmatprep.subr.mxu0 0.0
    %271 = vmatpush1.msra.mxu0 %v194
    %272 = vmatprep.subr.mxu0 0.0
    %273 = vmatpush1.msra.mxu0 %v195
    %274 = vmatprep.subr.mxu0 0.0
    %275 = vmatpush1.msra.mxu0 %v196
    %276 = vmatprep.subr.mxu0 0.0
    %277 = vmatpush1.msra.mxu0 %v197
    %278 = vmatprep.subr.mxu0 0.0
    %279 = vmatpush1.msra.mxu0 %v198
    %280 = vmatprep.subr.mxu0 0.0
    %281 = vmatpush1.msra.mxu0 %v199
    %282 = vmatprep.subr.mxu0 0.0
    %283 = vmatpush1.msra.mxu0 %v200
    %284 = vmatprep.subr.mxu0 0.0
    %285 = vmatpush1.msra.mxu0 %v201
    %286 = vmatprep.subr.mxu0 0.0
    %287 = vmatpush1.msra.mxu0 %v202
    %288 = vmatprep.subr.mxu0 0.0
    %289 = vmatpush1.msra.mxu0 %v203
    %290 = vmatprep.subr.mxu0 0.0
    %291 = vmatpush1.msra.mxu0 %v204
    %292 = vmatprep.mubr.f32.mxu0 %v150
    %293 = vmatmul.mubr.f32.gmra.mrb[0].mxu0 %v149
    %v294 = vpop.f32.mrb[0].mxu0
    %v295 = vadd.f32 %v226, %v294
    %v296 = vpop.f32.mrb[0].mxu0
    %297 = vmatprep.mubr.f32.mxu0 %v153
    %298 = vmatmul.mubr.f32.gmra.mrb[0].mxu0 %v152
    %v299 = vpop.f32.mrb[0].mxu0
    %v300 = vadd.f32 %v226, %v299
    %v301 = vpop.f32.mrb[0].mxu0
    %302 = vmatprep.mubr.f32.mxu0 %v156
    %303 = vmatmul.mubr.f32.gmra.mrb[0].mxu0 %v155
    %v304 = vpop.f32.mrb[0].mxu0
    %v305 = vadd.f32 %v226, %v304
    %v306 = vpop.f32.mrb[0].mxu0
    %307 = vmatprep.mubr.f32.mxu0 %v159
    %308 = vmatmul.mubr.f32.gmra.mrb[0].mxu0 %v158
    %v309 = vpop.f32.mrb[0].mxu0
    %v310 = vadd.f32 %v226, %v309
    %v311 = vpop.f32.mrb[0].mxu0
    %312 = vmatprep.mubr.f32.mxu0 %v162
    %313 = vmatmul.mubr.f32.gmra.mrb[0].mxu0 %v161
    %v314 = vpop.f32.mrb[0].mxu0
    %v315 = vadd.f32 %v226, %v314
    %v316 = vpop.f32.mrb[0].mxu0
    %317 = vmatprep.mubr.f32.mxu0 %v165
    %318 = vmatmul.mubr.f32.gmra.mrb[0].mxu0 %v164
    %v319 = vpop.f32.mrb[0].mxu0
    %v320 = vadd.f32 %v226, %v319
    %v321 = vpop.f32.mrb[0].mxu0
    %322 = vmatprep.mubr.f32.mxu0 %v168
    %323 = vmatmul.mubr.f32.gmra.mrb[0].mxu0 %v167
    %v324 = vpop.f32.mrb[0].mxu0
    %v325 = vadd.f32 %v226, %v324
    %v326 = vpop.f32.mrb[0].mxu0
    %327 = vmatprep.mubr.f32.mxu0 %v171
    %328 = vmatmul.mubr.f32.gmra.mrb[0].mxu0 %v170
    %v329 = vpop.f32.mrb[0].mxu0
    %v330 = vadd.f32 %v226, %v329
    %v331 = vpop.f32.mrb[0].mxu0
    %332 = vdwg.mxu0
    %333 = vmatprep.subr.mxu0 0.0
    %334 = vmatpush1.msra.mxu0 %v205
    %335 = vmatprep.subr.mxu0 0.0
    %336 = vmatpush1.msra.mxu0 %v206
    %337 = vmatprep.subr.mxu0 0.0
    %338 = vmatpush1.msra.mxu0 %v207
    %339 = vmatprep.subr.mxu0 0.0
    %340 = vmatpush1.msra.mxu0 %v208
    %341 = vmatprep.subr.mxu0 0.0
    %342 = vmatpush1.msra.mxu0 %v209
    %343 = vmatprep.subr.mxu0 0.0
    %344 = vmatpush1.msra.mxu0 %v210
    %345 = vmatprep.subr.mxu0 0.0
    %346 = vmatpush1.msra.mxu0 %v211
    %347 = vmatprep.subr.mxu0 0.0
    %348 = vmatpush1.msra.mxu0 %v212
    %349 = vmatprep.subr.mxu0 0.0
    %350 = vmatpush1.msra.mxu0 %v213
    %351 = vmatprep.subr.mxu0 0.0
    %352 = vmatpush1.msra.mxu0 %v214
    %353 = vmatprep.subr.mxu0 0.0
    %354 = vmatpush1.msra.mxu0 %v215
    %355 = vmatprep.subr.mxu0 0.0
    %356 = vmatpush1.msra.mxu0 %v216
    %357 = vmatprep.subr.mxu0 0.0
    %358 = vmatpush1.msra.mxu0 %v217
    %359 = vmatprep.subr.mxu0 0.0
    %360 = vmatpush1.msra.mxu0 %v218
    %361 = vmatprep.subr.mxu0 0.0
    %362 = vmatpush1.msra.mxu0 %v219
    %363 = vmatprep.subr.mxu0 0.0
    %364 = vmatpush1.msra.mxu0 %v220
    %365 = vmatprep.subr.mxu0 0.0
    %366 = vmatpush1.msra.mxu0 0.0
    %367 = vmatprep.subr.mxu0 0.0
    %368 = vmatpush1.msra.mxu0 0.0
    %369 = vmatprep.subr.mxu0 0.0
    %370 = vmatpush1.msra.mxu0 0.0
    %371 = vmatprep.subr.mxu0 0.0
    %372 = vmatpush1.msra.mxu0 0.0
    %373 = vmatprep.subr.mxu0 0.0
    %374 = vmatpush1.msra.mxu0 0.0
    %375 = vmatprep.subr.mxu0 0.0
    %376 = vmatpush1.msra.mxu0 0.0
    %377 = vmatprep.subr.mxu0 0.0
    %378 = vmatpush1.msra.mxu0 0.0
    %379 = vmatprep.subr.mxu0 0.0
    %380 = vmatpush1.msra.mxu0 0.0
    %381 = vmatprep.subr.mxu0 0.0
    %382 = vmatpush1.msra.mxu0 0.0
    %383 = vmatprep.subr.mxu0 0.0
    %384 = vmatpush1.msra.mxu0 0.0
    %385 = vmatprep.subr.mxu0 0.0
    %386 = vmatpush1.msra.mxu0 0.0
    %387 = vmatprep.subr.mxu0 0.0
    %388 = vmatpush1.msra.mxu0 0.0
    %389 = vmatprep.subr.mxu0 0.0
    %390 = vmatpush1.msra.mxu0 0.0
    %391 = vmatprep.subr.mxu0 0.0
    %392 = vmatpush1.msra.mxu0 0.0
    %393 = vmatprep.subr.mxu0 0.0
    %394 = vmatpush1.msra.mxu0 0.0
    %395 = vmatprep.subr.mxu0 0.0
    %396 = vmatpush1.msra.mxu0 0.0
    %397 = vmatprep.mubr.f32.mxu0 0.0
    %398 = vmatmul.mubr.f32.gmra.mrb[0].mxu0 %v151
    %v399 = vpop.f32.mrb[0].mxu0
    %v400 = vadd.f32 %v295, %v399
    %v401 = vpop.f32.mrb[0].mxu0
    %402 = vmatprep.mubr.f32.mxu0 0.0
    %403 = vmatmul.mubr.f32.gmra.mrb[0].mxu0 %v154
    %v404 = vpop.f32.mrb[0].mxu0
    %v405 = vadd.f32 %v300, %v404
    %v406 = vpop.f32.mrb[0].mxu0
    %407 = vmatprep.mubr.f32.mxu0 0.0
    %408 = vmatmul.mubr.f32.gmra.mrb[0].mxu0 %v157
    %v409 = vpop.f32.mrb[0].mxu0
    %v410 = vadd.f32 %v305, %v409
    %v411 = vpop.f32.mrb[0].mxu0
    %412 = vmatprep.mubr.f32.mxu0 0.0
    %413 = vmatmul.mubr.f32.gmra.mrb[0].mxu0 %v160
    %v414 = vpop.f32.mrb[0].mxu0
    %v415 = vadd.f32 %v310, %v414
    %v416 = vpop.f32.mrb[0].mxu0
    %417 = vmatprep.mubr.f32.mxu0 0.0
    %418 = vmatmul.mubr.f32.gmra.mrb[0].mxu0 %v163
    %v419 = vpop.f32.mrb[0].mxu0
    %v420 = vadd.f32 %v315, %v419
    %v421 = vpop.f32.mrb[0].mxu0
    %422 = vmatprep.mubr.f32.mxu0 0.0
    %423 = vmatmul.mubr.f32.gmra.mrb[0].mxu0 %v166
    %v424 = vpop.f32.mrb[0].mxu0
    %v425 = vadd.f32 %v320, %v424
    %v426 = vpop.f32.mrb[0].mxu0
    %427 = vmatprep.mubr.f32.mxu0 0.0
    %428 = vmatmul.mubr.f32.gmra.mrb[0].mxu0 %v169
    %v429 = vpop.f32.mrb[0].mxu0
    %v430 = vadd.f32 %v325, %v429
    %v431 = vpop.f32.mrb[0].mxu0
    %432 = vmatprep.mubr.f32.mxu0 0.0
    %433 = vmatmul.mubr.f32.gmra.mrb[0].mxu0 %v172
    %v434 = vpop.f32.mrb[0].mxu0
    %v435 = vadd.f32 %v330, %v434
    %v436 = vpop.f32.mrb[0].mxu0
    %437 = vdwg.mxu0
    %v438 = vmax.f32 %v400, 0.0
    %v439 = vmax.f32 %v405, 0.0
    %v440 = vmax.f32 %v410, 0.0
    %v441 = vmax.f32 %v415, 0.0
    %v442 = vmax.f32 %v420, 0.0
    %v443 = vmax.f32 %v425, 0.0
    %v444 = vmax.f32 %v430, 0.0
    %v445 = vmax.f32 %v435, 0.0
    %446 = vst [vmem:[#allocation2 + $0x8] sm:$0xff] %v438
    %447 = vst [vmem:[#allocation2 + $0x10] sm:$0xff] %v439
    %448 = vst [vmem:[#allocation2 + $0x28] sm:$0xff] %v440
    %449 = vst [vmem:[#allocation2 + $0x30] sm:$0xff] %v441
    %450 = vst [vmem:[#allocation2 + $0x48] sm:$0xff] %v442
    %451 = vst [vmem:[#allocation2 + $0x50] sm:$0xff] %v443
    %452 = vst [vmem:[#allocation2 + $0x68] sm:$0xff] %v444
    %453 = vst [vmem:[#allocation2 + $0x70] sm:$0xff] %v445
    %v454 = vld [vmem:[#allocation2 + $0x6] sm:$0xff]
    %v455 = vld [vmem:[#allocation2 + $0xe] sm:$0xff]
    %v456 = vld [vmem:[#allocation2 + $0x26] sm:$0xff]
    %v457 = vld [vmem:[#allocation2 + $0x2e] sm:$0xff]
    %v458 = vld [vmem:[#allocation2 + $0x46] sm:$0xff]
    %v459 = vld [vmem:[#allocation2 + $0x4e] sm:$0xff]
    %v460 = vld [vmem:[#allocation2 + $0x66] sm:$0xff]
    %v461 = vld [vmem:[#allocation2 + $0x6e] sm:$0xff]
    %462 = vst [vmem:[#allocation3] sm:$0xff] %v454
    %463 = vst [vmem:[#allocation3 + $0x18] sm:$0xff] %v455
    %464 = vst [vmem:[#allocation3 + $0x30] sm:$0xff] %v456
    %465 = vst [vmem:[#allocation3 + $0x48] sm:$0xff] %v457
    %466 = vst [vmem:[#allocation3 + $0x60] sm:$0xff] %v458
    %467 = vst [vmem:[#allocation3 + $0x78] sm:$0xff] %v459
    %468 = vst [vmem:[#allocation3 + $0x90] sm:$0xff] %v460
    %469 = vst [vmem:[#allocation3 + $0xa8] sm:$0xff] %v461
    %v470 = vld [vmem:[#allocation2 + $0x8] sm:$0xff]
    %v471 = vld [vmem:[#allocation2 + $0x10] sm:$0xff]
    %v472 = vld [vmem:[#allocation2 + $0x28] sm:$0xff]
    %v473 = vld [vmem:[#allocation2 + $0x30] sm:$0xff]
    %v474 = vld [vmem:[#allocation2 + $0x48] sm:$0xff]
    %v475 = vld [vmem:[#allocation2 + $0x50] sm:$0xff]
    %v476 = vld [vmem:[#allocation2 + $0x68] sm:$0xff]
    %v477 = vld [vmem:[#allocation2 + $0x70] sm:$0xff]
    %478 = vst [vmem:[#allocation3 + $0x8] sm:$0xff] %v470
    %479 = vst [vmem:[#allocation3 + $0x20] sm:$0xff] %v471
    %480 = vst [vmem:[#allocation3 + $0x38] sm:$0xff] %v472
    %481 = vst [vmem:[#allocation3 + $0x50] sm:$0xff] %v473
    %482 = vst [vmem:[#allocation3 + $0x68] sm:$0xff] %v474
    %483 = vst [vmem:[#allocation3 + $0x80] sm:$0xff] %v475
    %484 = vst [vmem:[#allocation3 + $0x98] sm:$0xff] %v476
    %485 = vst [vmem:[#allocation3 + $0xb0] sm:$0xff] %v477
    %v486 = vld [vmem:[#allocation2 + $0xa] sm:$0xff]
    %v487 = vld [vmem:[#allocation2 + $0x12] sm:$0xff]
    %v488 = vld [vmem:[#allocation2 + $0x2a] sm:$0xff]
    %v489 = vld [vmem:[#allocation2 + $0x32] sm:$0xff]
    %v490 = vld [vmem:[#allocation2 + $0x4a] sm:$0xff]
    %v491 = vld [vmem:[#allocation2 + $0x52] sm:$0xff]
    %v492 = vld [vmem:[#allocation2 + $0x6a] sm:$0xff]
    %v493 = vld [vmem:[#allocation2 + $0x72] sm:$0xff]
    %494 = vst [vmem:[#allocation3 + $0x10] sm:$0xff] %v486
    %495 = vst [vmem:[#allocation3 + $0x28] sm:$0xff] %v487
    %496 = vst [vmem:[#allocation3 + $0x40] sm:$0xff] %v488
    %497 = vst [vmem:[#allocation3 + $0x58] sm:$0xff] %v489
    %498 = vst [vmem:[#allocation3 + $0x70] sm:$0xff] %v490
    %499 = vst [vmem:[#allocation3 + $0x88] sm:$0xff] %v491
    %500 = vst [vmem:[#allocation3 + $0xa0] sm:$0xff] %v492
    %501 = vst [vmem:[#allocation3 + $0xb8] sm:$0xff] %v493
    %v502 = vld [vmem:[#allocation3] sm:$0xff]
    %v503 = vld [vmem:[#allocation3 + $0x8] sm:$0xff]
    %v504 = vld [vmem:[#allocation3 + $0x10] sm:$0xff]
    %v505 = vld [vmem:[#allocation3 + $0x18] sm:$0xff]
    %v506 = vld [vmem:[#allocation3 + $0x20] sm:$0xff]
    %v507 = vld [vmem:[#allocation3 + $0x28] sm:$0xff]
    %v508 = vld [vmem:[#allocation3 + $0x30] sm:$0xff]
    %v509 = vld [vmem:[#allocation3 + $0x38] sm:$0xff]
    %v510 = vld [vmem:[#allocation3 + $0x40] sm:$0xff]
    %v511 = vld [vmem:[#allocation3 + $0x48] sm:$0xff]
    %v512 = vld [vmem:[#allocation3 + $0x50] sm:$0xff]
    %v513 = vld [vmem:[#allocation3 + $0x58] sm:$0xff]
    %v514 = vld [vmem:[#allocation3 + $0x60] sm:$0xff]
    %v515 = vld [vmem:[#allocation3 + $0x68] sm:$0xff]
    %v516 = vld [vmem:[#allocation3 + $0x70] sm:$0xff]
    %v517 = vld [vmem:[#allocation3 + $0x78] sm:$0xff]
    %v518 = vld [vmem:[#allocation3 + $0x80] sm:$0xff]
    %v519 = vld [vmem:[#allocation3 + $0x88] sm:$0xff]
    %v520 = vld [vmem:[#allocation3 + $0x90] sm:$0xff]
    %v521 = vld [vmem:[#allocation3 + $0x98] sm:$0xff]
    %v522 = vld [vmem:[#allocation3 + $0xa0] sm:$0xff]
    %v523 = vld [vmem:[#allocation3 + $0xa8] sm:$0xff]
    %v524 = vld [vmem:[#allocation3 + $0xb0] sm:$0xff]
    %v525 = vld [vmem:[#allocation3 + $0xb8] sm:$0xff]
    %v526 = vld [vmem:[#allocation7] sm:$0xff]
    %v527 = vld [vmem:[#allocation7 + $0x8] sm:$0xff]
    %v528 = vld [vmem:[#allocation7 + $0x10] sm:$0xff]
    %v529 = vld [vmem:[#allocation7 + $0x18] sm:$0xff]
    %v530 = vld [vmem:[#allocation7 + $0x20] sm:$0xff]
    %v531 = vld [vmem:[#allocation7 + $0x28] sm:$0xff]
    %v532 = vld [vmem:[#allocation7 + $0x30] sm:$0xff]
    %v533 = vld [vmem:[#allocation7 + $0x38] sm:$0xff]
    %v534 = vld [vmem:[#allocation7 + $0x40] sm:$0xff]
    %v535 = vld [vmem:[#allocation7 + $0x48] sm:$0xff]
    %v536 = vld [vmem:[#allocation7 + $0x50] sm:$0xff]
    %v537 = vld [vmem:[#allocation7 + $0x58] sm:$0xff]
    %v538 = vld [vmem:[#allocation7 + $0x60] sm:$0xff]
    %v539 = vld [vmem:[#allocation7 + $0x68] sm:$0xff]
    %v540 = vld [vmem:[#allocation7 + $0x70] sm:$0xff]
    %v541 = vld [vmem:[#allocation7 + $0x78] sm:$0xff]
    %v542 = vld [vmem:[#allocation7 + $0x80] sm:$0xff]
    %v543 = vld [vmem:[#allocation7 + $0x88] sm:$0xff]
    %v544 = vld [vmem:[#allocation7 + $0x90] sm:$0xff]
    %v545 = vld [vmem:[#allocation7 + $0x98] sm:$0xff]
    %v546 = vld [vmem:[#allocation7 + $0xa0] sm:$0xff]
    %v547 = vld [vmem:[#allocation7 + $0xa8] sm:$0xff]
    %v548 = vld [vmem:[#allocation7 + $0xb0] sm:$0xff]
    %v549 = vld [vmem:[#allocation7 + $0xb8] sm:$0xff]
    %v550 = vld [vmem:[#allocation7 + $0xc0] sm:$0xff]
    %v551 = vld [vmem:[#allocation7 + $0xc8] sm:$0xff]
    %v552 = vld [vmem:[#allocation7 + $0xd0] sm:$0xff]
    %v553 = vld [vmem:[#allocation7 + $0xd8] sm:$0xff]
    %v554 = vld [vmem:[#allocation7 + $0xe0] sm:$0xff]
    %v555 = vld [vmem:[#allocation7 + $0xe8] sm:$0xff]
    %v556 = vld [vmem:[#allocation7 + $0xf0] sm:$0xff]
    %v557 = vld [vmem:[#allocation7 + $0xf8] sm:$0xff]
    %v558 = vld [vmem:[#allocation7 + $0x100] sm:$0xff]
    %v559 = vld [vmem:[#allocation7 + $0x108] sm:$0xff]
    %v560 = vld [vmem:[#allocation7 + $0x110] sm:$0xff]
    %v561 = vld [vmem:[#allocation7 + $0x118] sm:$0xff]
    %v562 = vld [vmem:[#allocation7 + $0x120] sm:$0xff]
    %v563 = vld [vmem:[#allocation7 + $0x128] sm:$0xff]
    %v564 = vld [vmem:[#allocation7 + $0x130] sm:$0xff]
    %v565 = vld [vmem:[#allocation7 + $0x138] sm:$0xff]
    %v566 = vld [vmem:[#allocation7 + $0x140] sm:$0xff]
    %v567 = vld [vmem:[#allocation7 + $0x148] sm:$0xff]
    %v568 = vld [vmem:[#allocation7 + $0x150] sm:$0xff]
    %v569 = vld [vmem:[#allocation7 + $0x158] sm:$0xff]
    %v570 = vld [vmem:[#allocation7 + $0x160] sm:$0xff]
    %v571 = vld [vmem:[#allocation7 + $0x168] sm:$0xff]
    %v572 = vld [vmem:[#allocation7 + $0x170] sm:$0xff]
    %v573 = vld [vmem:[#allocation7 + $0x178] sm:$0xff]
    %v574 = vld [vmem:[%s4] sm:$0x1]
    %v576 = vlaneseq
    %v577 = vshrl.u32 %v576, 7
    %v578 = vsub.s32 0, %v577
    %v579 = vrot.slane %v574, %v578
    %581 = vmatprep.subr.mxu0 0.0
    %582 = vmatpush1.msra.mxu0 %v526
    %583 = vmatprep.subr.mxu0 0.0
    %584 = vmatpush1.msra.mxu0 %v527
    %585 = vmatprep.subr.mxu0 0.0
    %586 = vmatpush1.msra.mxu0 %v528
    %587 = vmatprep.subr.mxu0 0.0
    %588 = vmatpush1.msra.mxu0 %v529
    %589 = vmatprep.subr.mxu0 0.0
    %590 = vmatpush1.msra.mxu0 %v530
    %591 = vmatprep.subr.mxu0 0.0
    %592 = vmatpush1.msra.mxu0 %v531
    %593 = vmatprep.subr.mxu0 0.0
    %594 = vmatpush1.msra.mxu0 %v532
    %595 = vmatprep.subr.mxu0 0.0
    %596 = vmatpush1.msra.mxu0 %v533
    %597 = vmatprep.subr.mxu0 0.0
    %598 = vmatpush1.msra.mxu0 %v534
    %599 = vmatprep.subr.mxu0 0.0
    %600 = vmatpush1.msra.mxu0 %v535
    %601 = vmatprep.subr.mxu0 0.0
    %602 = vmatpush1.msra.mxu0 %v536
    %603 = vmatprep.subr.mxu0 0.0
    %604 = vmatpush1.msra.mxu0 %v537
    %605 = vmatprep.subr.mxu0 0.0
    %606 = vmatpush1.msra.mxu0 %v538
    %607 = vmatprep.subr.mxu0 0.0
    %608 = vmatpush1.msra.mxu0 %v539
    %609 = vmatprep.subr.mxu0 0.0
    %610 = vmatpush1.msra.mxu0 %v540
    %611 = vmatprep.subr.mxu0 0.0
    %612 = vmatpush1.msra.mxu0 %v541
    %613 = vmatprep.subr.mxu0 0.0
    %614 = vmatpush1.msra.mxu0 %v542
    %615 = vmatprep.subr.mxu0 0.0
    %616 = vmatpush1.msra.mxu0 %v543
    %617 = vmatprep.subr.mxu0 0.0
    %618 = vmatpush1.msra.mxu0 %v544
    %619 = vmatprep.subr.mxu0 0.0
    %620 = vmatpush1.msra.mxu0 %v545
    %621 = vmatprep.subr.mxu0 0.0
    %622 = vmatpush1.msra.mxu0 %v546
    %623 = vmatprep.subr.mxu0 0.0
    %624 = vmatpush1.msra.mxu0 %v547
    %625 = vmatprep.subr.mxu0 0.0
    %626 = vmatpush1.msra.mxu0 %v548
    %627 = vmatprep.subr.mxu0 0.0
    %628 = vmatpush1.msra.mxu0 %v549
    %629 = vmatprep.subr.mxu0 0.0
    %630 = vmatpush1.msra.mxu0 %v550
    %631 = vmatprep.subr.mxu0 0.0
    %632 = vmatpush1.msra.mxu0 %v551
    %633 = vmatprep.subr.mxu0 0.0
    %634 = vmatpush1.msra.mxu0 %v552
    %635 = vmatprep.subr.mxu0 0.0
    %636 = vmatpush1.msra.mxu0 %v553
    %637 = vmatprep.subr.mxu0 0.0
    %638 = vmatpush1.msra.mxu0 %v554
    %639 = vmatprep.subr.mxu0 0.0
    %640 = vmatpush1.msra.mxu0 %v555
    %641 = vmatprep.subr.mxu0 0.0
    %642 = vmatpush1.msra.mxu0 %v556
    %643 = vmatprep.subr.mxu0 0.0
    %644 = vmatpush1.msra.mxu0 %v557
    %645 = vmatprep.mubr.f32.mxu0 %v503
    %646 = vmatmul.mubr.f32.gmra.mrb[0].mxu0 %v502
    %v647 = vpop.f32.mrb[0].mxu0
    %v648 = vadd.f32 %v579, %v647
    %v649 = vpop.f32.mrb[0].mxu0
    %650 = vmatprep.mubr.f32.mxu0 %v506
    %651 = vmatmul.mubr.f32.gmra.mrb[0].mxu0 %v505
    %v652 = vpop.f32.mrb[0].mxu0
    %v653 = vadd.f32 %v579, %v652
    %v654 = vpop.f32.mrb[0].mxu0
    %655 = vmatprep.mubr.f32.mxu0 %v509
    %656 = vmatmul.mubr.f32.gmra.mrb[0].mxu0 %v508
    %v657 = vpop.f32.mrb[0].mxu0
    %v658 = vadd.f32 %v579, %v657
    %v659 = vpop.f32.mrb[0].mxu0
    %660 = vmatprep.mubr.f32.mxu0 %v512
    %661 = vmatmul.mubr.f32.gmra.mrb[0].mxu0 %v511
    %v662 = vpop.f32.mrb[0].mxu0
    %v663 = vadd.f32 %v579, %v662
    %v664 = vpop.f32.mrb[0].mxu0
    %665 = vmatprep.mubr.f32.mxu0 %v515
    %666 = vmatmul.mubr.f32.gmra.mrb[0].mxu0 %v514
    %v667 = vpop.f32.mrb[0].mxu0
    %v668 = vadd.f32 %v579, %v667
    %v669 = vpop.f32.mrb[0].mxu0
    %670 = vmatprep.mubr.f32.mxu0 %v518
    %671 = vmatmul.mubr.f32.gmra.mrb[0].mxu0 %v517
    %v672 = vpop.f32.mrb[0].mxu0
    %v673 = vadd.f32 %v579, %v672
    %v674 = vpop.f32.mrb[0].mxu0
    %675 = vmatprep.mubr.f32.mxu0 %v521
    %676 = vmatmul.mubr.f32.gmra.mrb[0].mxu0 %v520
    %v677 = vpop.f32.mrb[0].mxu0
    %v678 = vadd.f32 %v579, %v677
    %v679 = vpop.f32.mrb[0].mxu0
    %680 = vmatprep.mubr.f32.mxu0 %v524
    %681 = vmatmul.mubr.f32.gmra.mrb[0].mxu0 %v523
    %v682 = vpop.f32.mrb[0].mxu0
    %v683 = vadd.f32 %v579, %v682
    %v684 = vpop.f32.mrb[0].mxu0
    %685 = vdwg.mxu0
    %686 = vmatprep.subr.mxu0 0.0
    %687 = vmatpush1.msra.mxu0 %v558
    %688 = vmatprep.subr.mxu0 0.0
    %689 = vmatpush1.msra.mxu0 %v559
    %690 = vmatprep.subr.mxu0 0.0
    %691 = vmatpush1.msra.mxu0 %v560
    %692 = vmatprep.subr.mxu0 0.0
    %693 = vmatpush1.msra.mxu0 %v561
    %694 = vmatprep.subr.mxu0 0.0
    %695 = vmatpush1.msra.mxu0 %v562
    %696 = vmatprep.subr.mxu0 0.0
    %697 = vmatpush1.msra.mxu0 %v563
    %698 = vmatprep.subr.mxu0 0.0
    %699 = vmatpush1.msra.mxu0 %v564
    %700 = vmatprep.subr.mxu0 0.0
    %701 = vmatpush1.msra.mxu0 %v565
    %702 = vmatprep.subr.mxu0 0.0
    %703 = vmatpush1.msra.mxu0 %v566
    %704 = vmatprep.subr.mxu0 0.0
    %705 = vmatpush1.msra.mxu0 %v567
    %706 = vmatprep.subr.mxu0 0.0
    %707 = vmatpush1.msra.mxu0 %v568
    %708 = vmatprep.subr.mxu0 0.0
    %709 = vmatpush1.msra.mxu0 %v569
    %710 = vmatprep.subr.mxu0 0.0
    %711 = vmatpush1.msra.mxu0 %v570
    %712 = vmatprep.subr.mxu0 0.0
    %713 = vmatpush1.msra.mxu0 %v571
    %714 = vmatprep.subr.mxu0 0.0
    %715 = vmatpush1.msra.mxu0 %v572
    %716 = vmatprep.subr.mxu0 0.0
    %717 = vmatpush1.msra.mxu0 %v573
    %718 = vmatprep.subr.mxu0 0.0
    %719 = vmatpush1.msra.mxu0 0.0
    %720 = vmatprep.subr.mxu0 0.0
    %721 = vmatpush1.msra.mxu0 0.0
    %722 = vmatprep.subr.mxu0 0.0
    %723 = vmatpush1.msra.mxu0 0.0
    %724 = vmatprep.subr.mxu0 0.0
    %725 = vmatpush1.msra.mxu0 0.0
    %726 = vmatprep.subr.mxu0 0.0
    %727 = vmatpush1.msra.mxu0 0.0
    %728 = vmatprep.subr.mxu0 0.0
    %729 = vmatpush1.msra.mxu0 0.0
    %730 = vmatprep.subr.mxu0 0.0
    %731 = vmatpush1.msra.mxu0 0.0
    %732 = vmatprep.subr.mxu0 0.0
    %733 = vmatpush1.msra.mxu0 0.0
    %734 = vmatprep.subr.mxu0 0.0
    %735 = vmatpush1.msra.mxu0 0.0
    %736 = vmatprep.subr.mxu0 0.0
    %737 = vmatpush1.msra.mxu0 0.0
    %738 = vmatprep.subr.mxu0 0.0
    %739 = vmatpush1.msra.mxu0 0.0
    %740 = vmatprep.subr.mxu0 0.0
    %741 = vmatpush1.msra.mxu0 0.0
    %742 = vmatprep.subr.mxu0 0.0
    %743 = vmatpush1.msra.mxu0 0.0
    %744 = vmatprep.subr.mxu0 0.0
    %745 = vmatpush1.msra.mxu0 0.0
    %746 = vmatprep.subr.mxu0 0.0
    %747 = vmatpush1.msra.mxu0 0.0
    %748 = vmatprep.subr.mxu0 0.0
    %749 = vmatpush1.msra.mxu0 0.0
    %750 = vmatprep.mubr.f32.mxu0 0.0
    %751 = vmatmul.mubr.f32.gmra.mrb[0].mxu0 %v504
    %v752 = vpop.f32.mrb[0].mxu0
    %v753 = vadd.f32 %v648, %v752
    %v754 = vpop.f32.mrb[0].mxu0
    %755 = vmatprep.mubr.f32.mxu0 0.0
    %756 = vmatmul.mubr.f32.gmra.mrb[0].mxu0 %v507
    %v757 = vpop.f32.mrb[0].mxu0
    %v758 = vadd.f32 %v653, %v757
    %v759 = vpop.f32.mrb[0].mxu0
    %760 = vmatprep.mubr.f32.mxu0 0.0
    %761 = vmatmul.mubr.f32.gmra.mrb[0].mxu0 %v510
    %v762 = vpop.f32.mrb[0].mxu0
    %v763 = vadd.f32 %v658, %v762
    %v764 = vpop.f32.mrb[0].mxu0
    %765 = vmatprep.mubr.f32.mxu0 0.0
    %766 = vmatmul.mubr.f32.gmra.mrb[0].mxu0 %v513
    %v767 = vpop.f32.mrb[0].mxu0
    %v768 = vadd.f32 %v663, %v767
    %v769 = vpop.f32.mrb[0].mxu0
    %770 = vmatprep.mubr.f32.mxu0 0.0
    %771 = vmatmul.mubr.f32.gmra.mrb[0].mxu0 %v516
    %v772 = vpop.f32.mrb[0].mxu0
    %v773 = vadd.f32 %v668, %v772
    %v774 = vpop.f32.mrb[0].mxu0
    %775 = vmatprep.mubr.f32.mxu0 0.0
    %776 = vmatmul.mubr.f32.gmra.mrb[0].mxu0 %v519
    %v777 = vpop.f32.mrb[0].mxu0
    %v778 = vadd.f32 %v673, %v777
    %v779 = vpop.f32.mrb[0].mxu0
    %780 = vmatprep.mubr.f32.mxu0 0.0
    %781 = vmatmul.mubr.f32.gmra.mrb[0].mxu0 %v522
    %v782 = vpop.f32.mrb[0].mxu0
    %v783 = vadd.f32 %v678, %v782
    %v784 = vpop.f32.mrb[0].mxu0
    %785 = vmatprep.mubr.f32.mxu0 0.0
    %786 = vmatmul.mubr.f32.gmra.mrb[0].mxu0 %v525
    %v787 = vpop.f32.mrb[0].mxu0
    %v788 = vadd.f32 %v683, %v787
    %v789 = vpop.f32.mrb[0].mxu0
    %790 = vdwg.mxu0
    %v791 = vmax.f32 %v753, 0.0
    %v792 = vmax.f32 %v758, 0.0
    %v793 = vmax.f32 %v763, 0.0
    %v794 = vmax.f32 %v768, 0.0
    %v795 = vmax.f32 %v773, 0.0
    %v796 = vmax.f32 %v778, 0.0
    %v797 = vmax.f32 %v783, 0.0
    %v798 = vmax.f32 %v788, 0.0
    %v799 = vsub.f32 %v795, %v791
    %v800 = vsub.f32 %v796, %v792
    %v801 = vsub.f32 %v797, %v793
    %v802 = vsub.f32 %v798, %v794
    %v803 = vand.u32 2147483647, %v799
    %v804 = vand.u32 2147483647, %v800
    %v805 = vand.u32 2147483647, %v801
    %v806 = vand.u32 2147483647, %v802
    %807 = vst [vmem:[#allocation2 + $0x8] sm:$0xff] %v803
    %808 = vst [vmem:[#allocation2 + $0x10] sm:$0xff] %v804
    %809 = vst [vmem:[#allocation2 + $0x28] sm:$0xff] %v805
    %810 = vst [vmem:[#allocation2 + $0x30] sm:$0xff] %v806
    %v811 = vld [vmem:[#allocation2 + $0x7] sm:$0xff]
    %v812 = vld [vmem:[#allocation2 + $0xf] sm:$0xff]
    %v813 = vld [vmem:[#allocation2 + $0x27] sm:$0xff]
    %v814 = vld [vmem:[#allocation2 + $0x2f] sm:$0xff]
    %815 = vst [vmem:[#allocation3] sm:$0xff] %v811
    %816 = vst [vmem:[#allocation3 + $0x18] sm:$0xff] %v812
    %817 = vst [vmem:[#allocation3 + $0x30] sm:$0xff] %v813
    %818 = vst [vmem:[#allocation3 + $0x48] sm:$0xff] %v814
    %v819 = vld [vmem:[#allocation2 + $0x8] sm:$0xff]
    %v820 = vld [vmem:[#allocation2 + $0x10] sm:$0xff]
    %v821 = vld [vmem:[#allocation2 + $0x28] sm:$0xff]
    %v822 = vld [vmem:[#allocation2 + $0x30] sm:$0xff]
    %823 = vst [vmem:[#allocation3 + $0x8] sm:$0xff] %v819
    %824 = vst [vmem:[#allocation3 + $0x20] sm:$0xff] %v820
    %825 = vst [vmem:[#allocation3 + $0x38] sm:$0xff] %v821
    %826 = vst [vmem:[#allocation3 + $0x50] sm:$0xff] %v822
    %v827 = vld [vmem:[#allocation2 + $0x9] sm:$0xff]
    %v828 = vld [vmem:[#allocation2 + $0x11] sm:$0xff]
    %v829 = vld [vmem:[#allocation2 + $0x29] sm:$0xff]
    %v830 = vld [vmem:[#allocation2 + $0x31] sm:$0xff]
    %831 = vst [vmem:[#allocation3 + $0x10] sm:$0xff] %v827
    %832 = vst [vmem:[#allocation3 + $0x28] sm:$0xff] %v828
    %833 = vst [vmem:[#allocation3 + $0x40] sm:$0xff] %v829
    %834 = vst [vmem:[#allocation3 + $0x58] sm:$0xff] %v830
    %v835 = vld [vmem:[#allocation3] sm:$0xff]
    %v836 = vld [vmem:[#allocation3 + $0x8] sm:$0xff]
    %v837 = vld [vmem:[#allocation3 + $0x10] sm:$0xff]
    %v838 = vld [vmem:[#allocation3 + $0x18] sm:$0xff]
    %v839 = vld [vmem:[#allocation3 + $0x20] sm:$0xff]
    %v840 = vld [vmem:[#allocation3 + $0x28] sm:$0xff]
    %v841 = vld [vmem:[#allocation3 + $0x30] sm:$0xff]
    %v842 = vld [vmem:[#allocation3 + $0x38] sm:$0xff]
    %v843 = vld [vmem:[#allocation3 + $0x40] sm:$0xff]
    %v844 = vld [vmem:[#allocation3 + $0x48] sm:$0xff]
    %v845 = vld [vmem:[#allocation3 + $0x50] sm:$0xff]
    %v846 = vld [vmem:[#allocation3 + $0x58] sm:$0xff]
    %v847 = vld [vmem:[#allocation9] sm:$0xff]
    %v848 = vld [vmem:[#allocation9 + $0x8] sm:$0xff]
    %v849 = vld [vmem:[#allocation9 + $0x10] sm:$0xff]
    %v850 = vld [vmem:[#allocation9 + $0x18] sm:$0xff]
    %v851 = vld [vmem:[#allocation9 + $0x20] sm:$0xff]
    %v852 = vld [vmem:[#allocation9 + $0x28] sm:$0xff]
    %v853 = vld [vmem:[#allocation9 + $0x30] sm:$0xff]
    %v854 = vld [vmem:[#allocation9 + $0x38] sm:$0xff]
    %v855 = vld [vmem:[#allocation9 + $0x40] sm:$0xff]
    %v856 = vld [vmem:[#allocation9 + $0x48] sm:$0xff]
    %v857 = vld [vmem:[#allocation9 + $0x50] sm:$0xff]
    %v858 = vld [vmem:[#allocation9 + $0x58] sm:$0xff]
    %v859 = vld [vmem:[#allocation9 + $0x60] sm:$0xff]
    %v860 = vld [vmem:[#allocation9 + $0x68] sm:$0xff]
    %v861 = vld [vmem:[#allocation9 + $0x70] sm:$0xff]
    %v862 = vld [vmem:[#allocation9 + $0x78] sm:$0xff]
    %v863 = vld [vmem:[#allocation9 + $0x80] sm:$0xff]
    %v864 = vld [vmem:[#allocation9 + $0x88] sm:$0xff]
    %v865 = vld [vmem:[#allocation9 + $0x90] sm:$0xff]
    %v866 = vld [vmem:[#allocation9 + $0x98] sm:$0xff]
    %v867 = vld [vmem:[#allocation9 + $0xa0] sm:$0xff]
    %v868 = vld [vmem:[#allocation9 + $0xa8] sm:$0xff]
    %v869 = vld [vmem:[#allocation9 + $0xb0] sm:$0xff]
    %v870 = vld [vmem:[#allocation9 + $0xb8] sm:$0xff]
    %v871 = vld [vmem:[#allocation9 + $0xc0] sm:$0xff]
    %v872 = vld [vmem:[#allocation9 + $0xc8] sm:$0xff]
    %v873 = vld [vmem:[#allocation9 + $0xd0] sm:$0xff]
    %v874 = vld [vmem:[#allocation9 + $0xd8] sm:$0xff]
    %v875 = vld [vmem:[#allocation9 + $0xe0] sm:$0xff]
    %v876 = vld [vmem:[#allocation9 + $0xe8] sm:$0xff]
    %v877 = vld [vmem:[#allocation9 + $0xf0] sm:$0xff]
    %v878 = vld [vmem:[#allocation9 + $0xf8] sm:$0xff]
    %v879 = vld [vmem:[#allocation9 + $0x100] sm:$0xff]
    %v880 = vld [vmem:[#allocation9 + $0x108] sm:$0xff]
    %v881 = vld [vmem:[#allocation9 + $0x110] sm:$0xff]
    %v882 = vld [vmem:[#allocation9 + $0x118] sm:$0xff]
    %v883 = vld [vmem:[#allocation9 + $0x120] sm:$0xff]
    %v884 = vld [vmem:[#allocation9 + $0x128] sm:$0xff]
    %v885 = vld [vmem:[#allocation9 + $0x130] sm:$0xff]
    %v886 = vld [vmem:[#allocation9 + $0x138] sm:$0xff]
    %v887 = vld [vmem:[#allocation9 + $0x140] sm:$0xff]
    %v888 = vld [vmem:[#allocation9 + $0x148] sm:$0xff]
    %v889 = vld [vmem:[#allocation9 + $0x150] sm:$0xff]
    %v890 = vld [vmem:[#allocation9 + $0x158] sm:$0xff]
    %v891 = vld [vmem:[#allocation9 + $0x160] sm:$0xff]
    %v892 = vld [vmem:[#allocation9 + $0x168] sm:$0xff]
    %v893 = vld [vmem:[#allocation9 + $0x170] sm:$0xff]
    %v894 = vld [vmem:[#allocation9 + $0x178] sm:$0xff]
    %v895 = vld [vmem:[%s6] sm:$0x1]
    %v897 = vlaneseq
    %v898 = vshrl.u32 %v897, 7
    %v899 = vsub.s32 0, %v898
    %v900 = vrot.slane %v895, %v899
    %902 = vmatprep.subr.mxu0 0.0
    %903 = vmatpush1.msra.mxu0 %v847
    %904 = vmatprep.subr.mxu0 0.0
    %905 = vmatpush1.msra.mxu0 %v848
    %906 = vmatprep.subr.mxu0 0.0
    %907 = vmatpush1.msra.mxu0 %v849
    %908 = vmatprep.subr.mxu0 0.0
    %909 = vmatpush1.msra.mxu0 %v850
    %910 = vmatprep.subr.mxu0 0.0
    %911 = vmatpush1.msra.mxu0 %v851
    %912 = vmatprep.subr.mxu0 0.0
    %913 = vmatpush1.msra.mxu0 %v852
    %914 = vmatprep.subr.mxu0 0.0
    %915 = vmatpush1.msra.mxu0 %v853
    %916 = vmatprep.subr.mxu0 0.0
    %917 = vmatpush1.msra.mxu0 %v854
    %918 = vmatprep.subr.mxu0 0.0
    %919 = vmatpush1.msra.mxu0 %v855
    %920 = vmatprep.subr.mxu0 0.0
    %921 = vmatpush1.msra.mxu0 %v856
    %922 = vmatprep.subr.mxu0 0.0
    %923 = vmatpush1.msra.mxu0 %v857
    %924 = vmatprep.subr.mxu0 0.0
    %925 = vmatpush1.msra.mxu0 %v858
    %926 = vmatprep.subr.mxu0 0.0
    %927 = vmatpush1.msra.mxu0 %v859
    %928 = vmatprep.subr.mxu0 0.0
    %929 = vmatpush1.msra.mxu0 %v860
    %930 = vmatprep.subr.mxu0 0.0
    %931 = vmatpush1.msra.mxu0 %v861
    %932 = vmatprep.subr.mxu0 0.0
    %933 = vmatpush1.msra.mxu0 %v862
    %934 = vmatprep.subr.mxu0 0.0
    %935 = vmatpush1.msra.mxu0 %v863
    %936 = vmatprep.subr.mxu0 0.0
    %937 = vmatpush1.msra.mxu0 %v864
    %938 = vmatprep.subr.mxu0 0.0
    %939 = vmatpush1.msra.mxu0 %v865
    %940 = vmatprep.subr.mxu0 0.0
    %941 = vmatpush1.msra.mxu0 %v866
    %942 = vmatprep.subr.mxu0 0.0
    %943 = vmatpush1.msra.mxu0 %v867
    %944 = vmatprep.subr.mxu0 0.0
    %945 = vmatpush1.msra.mxu0 %v868
    %946 = vmatprep.subr.mxu0 0.0
    %947 = vmatpush1.msra.mxu0 %v869
    %948 = vmatprep.subr.mxu0 0.0
    %949 = vmatpush1.msra.mxu0 %v870
    %950 = vmatprep.subr.mxu0 0.0
    %951 = vmatpush1.msra.mxu0 %v871
    %952 = vmatprep.subr.mxu0 0.0
    %953 = vmatpush1.msra.mxu0 %v872
    %954 = vmatprep.subr.mxu0 0.0
    %955 = vmatpush1.msra.mxu0 %v873
    %956 = vmatprep.subr.mxu0 0.0
    %957 = vmatpush1.msra.mxu0 %v874
    %958 = vmatprep.subr.mxu0 0.0
    %959 = vmatpush1.msra.mxu0 %v875
    %960 = vmatprep.subr.mxu0 0.0
    %961 = vmatpush1.msra.mxu0 %v876
    %962 = vmatprep.subr.mxu0 0.0
    %963 = vmatpush1.msra.mxu0 %v877
    %964 = vmatprep.subr.mxu0 0.0
    %965 = vmatpush1.msra.mxu0 %v878
    %966 = vmatprep.mubr.f32.mxu0 %v836
    %967 = vmatmul.mubr.f32.gmra.mrb[0].mxu0 %v835
    %v968 = vpop.f32.mrb[0].mxu0
    %v969 = vadd.f32 %v900, %v968
    %v970 = vpop.f32.mrb[0].mxu0
    %971 = vmatprep.mubr.f32.mxu0 %v839
    %972 = vmatmul.mubr.f32.gmra.mrb[0].mxu0 %v838
    %v973 = vpop.f32.mrb[0].mxu0
    %v974 = vadd.f32 %v900, %v973
    %v975 = vpop.f32.mrb[0].mxu0
    %976 = vmatprep.mubr.f32.mxu0 %v842
    %977 = vmatmul.mubr.f32.gmra.mrb[0].mxu0 %v841
    %v978 = vpop.f32.mrb[0].mxu0
    %v979 = vadd.f32 %v900, %v978
    %v980 = vpop.f32.mrb[0].mxu0
    %981 = vmatprep.mubr.f32.mxu0 %v845
    %982 = vmatmul.mubr.f32.gmra.mrb[0].mxu0 %v844
    %v983 = vpop.f32.mrb[0].mxu0
    %v984 = vadd.f32 %v900, %v983
    %v985 = vpop.f32.mrb[0].mxu0
    %986 = vdwg.mxu0
    %987 = vmatprep.subr.mxu0 0.0
    %988 = vmatpush1.msra.mxu0 %v879
    %989 = vmatprep.subr.mxu0 0.0
    %990 = vmatpush1.msra.mxu0 %v880
    %991 = vmatprep.subr.mxu0 0.0
    %992 = vmatpush1.msra.mxu0 %v881
    %993 = vmatprep.subr.mxu0 0.0
    %994 = vmatpush1.msra.mxu0 %v882
    %995 = vmatprep.subr.mxu0 0.0
    %996 = vmatpush1.msra.mxu0 %v883
    %997 = vmatprep.subr.mxu0 0.0
    %998 = vmatpush1.msra.mxu0 %v884
    %999 = vmatprep.subr.mxu0 0.0
    %1000 = vmatpush1.msra.mxu0 %v885
    %1001 = vmatprep.subr.mxu0 0.0
    %1002 = vmatpush1.msra.mxu0 %v886
    %1003 = vmatprep.subr.mxu0 0.0
    %1004 = vmatpush1.msra.mxu0 %v887
    %1005 = vmatprep.subr.mxu0 0.0
    %1006 = vmatpush1.msra.mxu0 %v888
    %1007 = vmatprep.subr.mxu0 0.0
    %1008 = vmatpush1.msra.mxu0 %v889
    %1009 = vmatprep.subr.mxu0 0.0
    %1010 = vmatpush1.msra.mxu0 %v890
    %1011 = vmatprep.subr.mxu0 0.0
    %1012 = vmatpush1.msra.mxu0 %v891
    %1013 = vmatprep.subr.mxu0 0.0
    %1014 = vmatpush1.msra.mxu0 %v892
    %1015 = vmatprep.subr.mxu0 0.0
    %1016 = vmatpush1.msra.mxu0 %v893
    %1017 = vmatprep.subr.mxu0 0.0
    %1018 = vmatpush1.msra.mxu0 %v894
    %1019 = vmatprep.subr.mxu0 0.0
    %1020 = vmatpush1.msra.mxu0 0.0
    %1021 = vmatprep.subr.mxu0 0.0
    %1022 = vmatpush1.msra.mxu0 0.0
    %1023 = vmatprep.subr.mxu0 0.0
    %1024 = vmatpush1.msra.mxu0 0.0
    %1025 = vmatprep.subr.mxu0 0.0
    %1026 = vmatpush1.msra.mxu0 0.0
    %1027 = vmatprep.subr.mxu0 0.0
    %1028 = vmatpush1.msra.mxu0 0.0
    %1029 = vmatprep.subr.mxu0 0.0
    %1030 = vmatpush1.msra.mxu0 0.0
    %1031 = vmatprep.subr.mxu0 0.0
    %1032 = vmatpush1.msra.mxu0 0.0
    %1033 = vmatprep.subr.mxu0 0.0
    %1034 = vmatpush1.msra.mxu0 0.0
    %1035 = vmatprep.subr.mxu0 0.0
    %1036 = vmatpush1.msra.mxu0 0.0
    %1037 = vmatprep.subr.mxu0 0.0
    %1038 = vmatpush1.msra.mxu0 0.0
    %1039 = vmatprep.subr.mxu0 0.0
    %1040 = vmatpush1.msra.mxu0 0.0
    %1041 = vmatprep.subr.mxu0 0.0
    %1042 = vmatpush1.msra.mxu0 0.0
    %1043 = vmatprep.subr.mxu0 0.0
    %1044 = vmatpush1.msra.mxu0 0.0
    %1045 = vmatprep.subr.mxu0 0.0
    %1046 = vmatpush1.msra.mxu0 0.0
    %1047 = vmatprep.subr.mxu0 0.0
    %1048 = vmatpush1.msra.mxu0 0.0
    %1049 = vmatprep.subr.mxu0 0.0
    %1050 = vmatpush1.msra.mxu0 0.0
    %1051 = vmatprep.mubr.f32.mxu0 0.0
    %1052 = vmatmul.mubr.f32.gmra.mrb[0].mxu0 %v837
    %v1053 = vpop.f32.mrb[0].mxu0
    %v1054 = vadd.f32 %v969, %v1053
    %v1055 = vpop.f32.mrb[0].mxu0
    %1056 = vmatprep.mubr.f32.mxu0 0.0
    %1057 = vmatmul.mubr.f32.gmra.mrb[0].mxu0 %v840
    %v1058 = vpop.f32.mrb[0].mxu0
    %v1059 = vadd.f32 %v974, %v1058
    %v1060 = vpop.f32.mrb[0].mxu0
    %1061 = vmatprep.mubr.f32.mxu0 0.0
    %1062 = vmatmul.mubr.f32.gmra.mrb[0].mxu0 %v843
    %v1063 = vpop.f32.mrb[0].mxu0
    %v1064 = vadd.f32 %v979, %v1063
    %v1065 = vpop.f32.mrb[0].mxu0
    %1066 = vmatprep.mubr.f32.mxu0 0.0
    %1067 = vmatmul.mubr.f32.gmra.mrb[0].mxu0 %v846
    %v1068 = vpop.f32.mrb[0].mxu0
    %v1069 = vadd.f32 %v984, %v1068
    %v1070 = vpop.f32.mrb[0].mxu0
    %1071 = vdwg.mxu0
    %v1072 = vmax.f32 %v1054, 0.0
    %v1073 = vmax.f32 %v1059, 0.0
    %v1074 = vmax.f32 %v1064, 0.0
    %v1075 = vmax.f32 %v1069, 0.0
    %v1076 = vld [vmem:[%s7] sm:$0xff]
    %v1077 = vld [vmem:[%s7 + $0x8] sm:$0xff]
    %v1078 = vld [vmem:[%s7 + $0x10] sm:$0xff]
    %v1079 = vld [vmem:[%s7 + $0x18] sm:$0xff]
    %v1080 = vld [vmem:[%s7 + $0x20] sm:$0xff]
    %v1081 = vld [vmem:[%s7 + $0x28] sm:$0xff]
    %v1082 = vld [vmem:[%s7 + $0x30] sm:$0xff]
    %v1083 = vld [vmem:[%s7 + $0x38] sm:$0xff]
    %v1084 = vld [vmem:[%s7 + $0x40] sm:$0xff]
    %v1085 = vld [vmem:[%s7 + $0x48] sm:$0xff]
    %v1086 = vld [vmem:[%s7 + $0x50] sm:$0xff]
    %v1087 = vld [vmem:[%s7 + $0x58] sm:$0xff]
    %v1088 = vld [vmem:[%s7 + $0x60] sm:$0xff]
    %v1089 = vld [vmem:[%s7 + $0x68] sm:$0xff]
    %v1090 = vld [vmem:[%s7 + $0x70] sm:$0xff]
    %v1091 = vld [vmem:[%s7 + $0x78] sm:$0xff]
    %1092 = vmatprep.subr.mxu0 0.0
    %1093 = vmatpush1.msra.mxu0 %v1076
    %1094 = vmatprep.subr.mxu0 0.0
    %1095 = vmatpush1.msra.mxu0 %v1077
    %1096 = vmatprep.subr.mxu0 0.0
    %1097 = vmatpush1.msra.mxu0 %v1078
    %1098 = vmatprep.subr.mxu0 0.0
    %1099 = vmatpush1.msra.mxu0 %v1079
    %1100 = vmatprep.subr.mxu0 0.0
    %1101 = vmatpush1.msra.mxu0 %v1080
    %1102 = vmatprep.subr.mxu0 0.0
    %1103 = vmatpush1.msra.mxu0 %v1081
    %1104 = vmatprep.subr.mxu0 0.0
    %1105 = vmatpush1.msra.mxu0 %v1082
    %1106 = vmatprep.subr.mxu0 0.0
    %1107 = vmatpush1.msra.mxu0 %v1083
    %1108 = vmatprep.subr.mxu0 0.0
    %1109 = vmatpush1.msra.mxu0 %v1084
    %1110 = vmatprep.subr.mxu0 0.0
    %1111 = vmatpush1.msra.mxu0 %v1085
    %1112 = vmatprep.subr.mxu0 0.0
    %1113 = vmatpush1.msra.mxu0 %v1086
    %1114 = vmatprep.subr.mxu0 0.0
    %1115 = vmatpush1.msra.mxu0 %v1087
    %1116 = vmatprep.subr.mxu0 0.0
    %1117 = vmatpush1.msra.mxu0 %v1088
    %1118 = vmatprep.subr.mxu0 0.0
    %1119 = vmatpush1.msra.mxu0 %v1089
    %1120 = vmatprep.subr.mxu0 0.0
    %1121 = vmatpush1.msra.mxu0 %v1090
    %1122 = vmatprep.subr.mxu0 0.0
    %1123 = vmatpush1.msra.mxu0 %v1091
    %1124 = vmatprep.subr.mxu0 0.0
    %1125 = vmatpush1.msra.mxu0 0.0
    %1126 = vmatprep.subr.mxu0 0.0
    %1127 = vmatpush1.msra.mxu0 0.0
    %1128 = vmatprep.subr.mxu0 0.0
    %1129 = vmatpush1.msra.mxu0 0.0
    %1130 = vmatprep.subr.mxu0 0.0
    %1131 = vmatpush1.msra.mxu0 0.0
    %1132 = vmatprep.subr.mxu0 0.0
    %1133 = vmatpush1.msra.mxu0 0.0
    %1134 = vmatprep.subr.mxu0 0.0
    %1135 = vmatpush1.msra.mxu0 0.0
    %1136 = vmatprep.subr.mxu0 0.0
    %1137 = vmatpush1.msra.mxu0 0.0
    %1138 = vmatprep.subr.mxu0 0.0
    %1139 = vmatpush1.msra.mxu0 0.0
    %1140 = vmatprep.subr.mxu0 0.0
    %1141 = vmatpush1.msra.mxu0 0.0
    %1142 = vmatprep.subr.mxu0 0.0
    %1143 = vmatpush1.msra.mxu0 0.0
    %1144 = vmatprep.subr.mxu0 0.0
    %1145 = vmatpush1.msra.mxu0 0.0
    %1146 = vmatprep.subr.mxu0 0.0
    %1147 = vmatpush1.msra.mxu0 0.0
    %1148 = vmatprep.subr.mxu0 0.0
    %1149 = vmatpush1.msra.mxu0 0.0
    %1150 = vmatprep.subr.mxu0 0.0
    %1151 = vmatpush1.msra.mxu0 0.0
    %1152 = vmatprep.subr.mxu0 0.0
    %1153 = vmatpush1.msra.mxu0 0.0
    %1154 = vmatprep.subr.mxu0 0.0
    %1155 = vmatpush1.msra.mxu0 0.0
    %1156 = vmatprep.mubr.f32.mxu0 0.0
    %1157 = vmatmul.mubr.f32.gmra.mrb[0].mxu0 %v1072
    %v1158 = vpop.f32.mrb[0].mxu0
    %v1159 = vadd.f32 0.0, %v1158
    %v1160 = vpop.f32.mrb[0].mxu0
    %1161 = vmatprep.mubr.f32.mxu0 0.0
    %1162 = vmatmul.mubr.f32.gmra.mrb[0].mxu0 %v1073
    %v1163 = vpop.f32.mrb[0].mxu0
    %v1164 = vadd.f32 0.0, %v1163
    %v1165 = vpop.f32.mrb[0].mxu0
    %1166 = vmatprep.mubr.f32.mxu0 0.0
    %1167 = vmatmul.mubr.f32.gmra.mrb[0].mxu0 %v1074
    %v1168 = vpop.f32.mrb[0].mxu0
    %v1169 = vadd.f32 0.0, %v1168
    %v1170 = vpop.f32.mrb[0].mxu0
    %1171 = vmatprep.mubr.f32.mxu0 0.0
    %1172 = vmatmul.mubr.f32.gmra.mrb[0].mxu0 %v1075
    %v1173 = vpop.f32.mrb[0].mxu0
    %v1174 = vadd.f32 0.0, %v1173
    %v1175 = vpop.f32.mrb[0].mxu0
    %1176 = vdwg.mxu0
    %v1177 = vld [vmem:[%s8] sm:$0xff]
    %v1178 = vld [vmem:[%s8 + $0x8] sm:$0xff]
    %v1179 = vmul.f32 %v1159, %v1177
    %v1180 = vmul.f32 %v1164, %v1178
    %v1181 = vmul.f32 %v1169, %v1177
    %v1182 = vmul.f32 %v1174, %v1178
    %vm1183 = vcmask 64512
    %v1184 = vsel %vm1183, %v1179, 0.0
    %v1185 = vsel %vm1183, %v1180, 0.0
    %v1186 = vadd.f32 %v1184, %v1185
    %v1187 = vrot.slane %v1186, 4
    %v1188 = vadd.f32 %v1186, %v1187
    %v1189 = vrot.slane %v1188, 2
    %v1190 = vadd.f32 %v1188, %v1189
    %v1191 = vrot.slane %v1190, 1
    %v1192 = vadd.f32 %v1190, %v1191
    %v1193 = vsel %vm1183, %v1181, 0.0
    %v1194 = vsel %vm1183, %v1182, 0.0
    %v1195 = vadd.f32 %v1193, %v1194
    %v1196 = vrot.slane %v1195, 4
    %v1197 = vadd.f32 %v1195, %v1196
    %v1198 = vrot.slane %v1197, 2
    %v1199 = vadd.f32 %v1197, %v1198
    %v1200 = vrot.slane %v1199, 1
    %v1201 = vadd.f32 %v1199, %v1200
    %1204 = vrot.lane.b32.xlu0 %v1192, 126
    %v1205 = vpop.permute.xlu0 %1204
    %1206 = vrot.lane.b32.xlu0 %v1201, 126
    %v1207 = vpop.permute.xlu0 %1206
    %v1210 = vadd.f32 %v1192, %v1205
    %v1211 = vadd.f32 %v1201, %v1207
    %1212 = vrot.lane.b32.xlu0 %v1192, 124
    %v1213 = vpop.permute.xlu0 %1212
    %1214 = vrot.lane.b32.xlu0 %v1201, 124
    %v1215 = vpop.permute.xlu0 %1214
    %v1218 = vadd.f32 %v1210, %v1213
    %v1219 = vadd.f32 %v1211, %v1215
    %1220 = vrot.lane.b32.xlu0 %v1192, 122
    %v1221 = vpop.permute.xlu0 %1220
    %1222 = vrot.lane.b32.xlu0 %v1201, 122
    %v1223 = vpop.permute.xlu0 %1222
    %v1226 = vadd.f32 %v1218, %v1221
    %v1227 = vadd.f32 %v1219, %v1223
    %v1228 = vld [vmem:[%s9] sm:$0x1]
    %v1230 = vlaneseq
    %v1231 = vshrl.u32 %v1230, 7
    %v1232 = vsub.s32 0, %v1231
    %v1233 = vrot.slane %v1228, %v1232
    %v1235 = vadd.f32 %v1226, %v1233
    %v1236 = vadd.f32 %v1227, %v1233
    %v1239 = vrot.slane %v1236, 7
    %vm1240 = vcmask 1041409
    %v1241 = vsel %vm1240, %v1239, %v1235
    %vm1243 = vcmask 9216
    %1244 = vst.msk [vmem:[#allocation10] sm:$0x3] %vm1243, %v1241
    // Predicated region
    $region54: #{tpu_custom_call.1} parent=1 // pred_check
      _
    $region55: #{tpu_custom_call.1} parent=1 // pred_check_branch
      %1246 = sbr.rel (0) target = $region57
    $region56: #{tpu_custom_call.1} parent=1 // pred_region
      %s1248 = ssub.s32 32, 32
      %1249 = vsyncadd [#allocation6], %s1248
      %s1251 = sshll.u32 [#allocation10], 4
      %s1252 = int_to_ptr.vmem [resolvable:$true] %s1251
      %1254 = dma.vmem_to_hbm [thread:$0]  %s1252, 32, %s10, [#allocation6]
    $region57: #{tpu_custom_call.1} parent=1 // pred_fallthru
      _
    // Predicated region
    $region58: #{tpu_custom_call.1} parent=1 // pred_check
      _
    $region59: #{tpu_custom_call.1} parent=1 // pred_check_branch
      %1256 = sbr.rel (0) target = $region61
    $region60: #{tpu_custom_call.1} parent=1 // pred_region
      %1257 = dma.done [#allocation6], 32
    $region61: #{tpu_custom_call.1} parent=1 // pred_fallthru
      _
    %1258 = vsyncpa [#allocation5], 1
    %1259 = vsyncpa [#allocation8], 1
    %1260 = vsyncpa [#allocation6], 1

</llo_original>
